<compile_context>
chip_gen: v5e
topology: v5e:2x2
jax: 0.10.0
libtpu: 0.0.40
codegen_flags: <defaults>
</compile_context>

<pallas_src>
import jax
import jax.numpy as jnp
from jax.experimental import pallas as pl
from jax.experimental.pallas import tpu as pltpu

# ---------------------------------------------------------------------------
# Model hyper-parameters (small, synthetic).
# ---------------------------------------------------------------------------
VOCAB = 32          # vocab_size
VOCAB_PAD = 128     # vocab padded to a full lane width (sliced back outside)
EMB = 32            # embedding_size
HID = 32            # hidden_size
NUM_LAYERS = 1
INPUT_SIZE = EMB + HID   # rnn input_size (embedding ++ context)
BATCH = 8
T_ENC = 8           # encoder input_length
T_TGT = 8           # target_batch length  -> T_OUT = T_TGT - 1 decode steps
T_OUT = T_TGT - 1
G4 = 4 * HID        # fused gate width (r | z | n_i | n_h) = 128 lanes


# ---------------------------------------------------------------------------
# Pallas kernel: whole teacher-forced decode in one invocation.
# ---------------------------------------------------------------------------
def _decoder_kernel(
    emb_ref,     # (T_OUT, B, E)   embedded decoder-input tokens
    enc_ref,     # (T_ENC, B, H)   encoder output
    h0_ref,      # (1, B, H)       initial hidden state (encoder hidden)
    w_e4_ref,    # (E, 4H)         [W_ir_e.T | W_iz_e.T | W_in_e.T | 0]
    w_c4_ref,    # (H, 4H)         [W_ir_c.T | W_iz_c.T | W_in_c.T | 0]
    w_h4_ref,    # (H, 4H)         [W_hr.T   | W_hz.T   | 0        | W_hn.T]
    b4_ref,      # (1, 4H)         [b_ir+b_hr | b_iz+b_hz | b_in | b_hn]
    w_fc_ref,    # (H, Vp)         fc weight, pre-transposed, V padded to 128
    b_fc_ref,    # (1, Vp)
    logits_ref,  # out (T_OUT, B, Vp)
    h_out_ref,   # out (1, B, H)
    gx_ref,      # scratch (T_OUT, B, 4H)  hoisted x_emb gate contribution
    hs_ref,      # scratch (T_OUT, B, H)   per-step hidden states
):
    # Loop-invariant: encoder output stays vreg-resident for the whole decode.
    enc = enc_ref[...]                                        # (T_ENC, B, H)

    # --- hoisted teacher-forced contribution: x_emb does not depend on h -----
    # One (T_OUT*B, E) x (E, 4H) MXU push + bias, stored once to VMEM scratch.
    emb_flat = emb_ref[...].reshape(T_OUT * BATCH, EMB)
    gx_ref[...] = (
        jnp.dot(emb_flat, w_e4_ref[...], preferred_element_type=jnp.float32)
        + b4_ref[...]
    ).reshape(T_OUT, BATCH, G4)

    def step(t, h):
        # --- dot-product attention over encoder time (keepdims layout) -------
        scores = jnp.sum(enc * h[None, :, :], axis=-1, keepdims=True)  # (T,B,1)
        m = jnp.max(scores, axis=0, keepdims=True)                     # (1,B,1)
        e = jnp.exp(scores - m)                                        # (T,B,1)
        inv = pl.reciprocal(jnp.sum(e, axis=0, keepdims=True), approx=True)
        ctx = jnp.sum((e * inv) * enc, axis=0)                         # (B, H)

        # --- GRU cell: one fused lane-dense (B, 4H) gate block ---------------
        g = (gx_ref[t]
             + jnp.dot(ctx, w_c4_ref[...], preferred_element_type=jnp.float32)
             + jnp.dot(h,   w_h4_ref[...], preferred_element_type=jnp.float32))
        r = jax.nn.sigmoid(g[:, 0 * HID:1 * HID])
        z = jax.nn.sigmoid(g[:, 1 * HID:2 * HID])
        n = jnp.tanh(g[:, 2 * HID:3 * HID] + r * g[:, 3 * HID:4 * HID])
        h_new = (1.0 - z) * n + z * h                                  # (B, H)

        hs_ref[t] = h_new          # fc projection happens after the loop
        return h_new

    h_final = jax.lax.fori_loop(0, T_OUT, step, h0_ref[0], unroll=True)
    h_out_ref[0] = h_final         # written exactly once, after the loop

    # --- post-loop batched fc projection: one lane-dense slab store ----------
    h_all = hs_ref[...].reshape(T_OUT * BATCH, HID)
    logits_ref[...] = (
        jnp.dot(h_all, w_fc_ref[...], preferred_element_type=jnp.float32)
        + b_fc_ref[...]
    ).reshape(T_OUT, BATCH, VOCAB_PAD)


@jax.jit
def attention_decoder_forward(tokens_emb, enc_out, h0, params):
    """tokens_emb: (T_out, B, E) f32, enc_out: (T_enc, B, H), h0: (1, B, H)."""
    # ---- free layout plumbing outside the kernel ----------------------------
    w_ih = params["w_ih"]                                   # (3H, E+H)
    w_hh = params["w_hh"]                                   # (3H, H)
    b_ih = params["b_ih"]                                   # (1, 3H)
    b_hh = params["b_hh"]                                   # (1, 3H)
    W_ir, W_iz, W_in_ = (w_ih[0 * HID:1 * HID],
                         w_ih[1 * HID:2 * HID],
                         w_ih[2 * HID:3 * HID])             # each (H, E+H)
    W_hr, W_hz, W_hn_ = (w_hh[0 * HID:1 * HID],
                         w_hh[1 * HID:2 * HID],
                         w_hh[2 * HID:3 * HID])             # each (H, H)
    z_eh = jnp.zeros((EMB, HID), jnp.float32)
    z_hh = jnp.zeros((HID, HID), jnp.float32)

    # Fused gate blocks, lane order: [r | z | n_input | n_hidden]  (width 4H=128)
    w_e4 = jnp.concatenate(
        [W_ir[:, :EMB].T, W_iz[:, :EMB].T, W_in_[:, :EMB].T, z_eh], axis=1)
    w_c4 = jnp.concatenate(
        [W_ir[:, EMB:].T, W_iz[:, EMB:].T, W_in_[:, EMB:].T, z_hh], axis=1)
    w_h4 = jnp.concatenate(
        [W_hr.T, W_hz.T, z_hh, W_hn_.T], axis=1)
    b4 = jnp.concatenate(
        [b_ih[:, 0 * HID:1 * HID] + b_hh[:, 0 * HID:1 * HID],
         b_ih[:, 1 * HID:2 * HID] + b_hh[:, 1 * HID:2 * HID],
         b_ih[:, 2 * HID:3 * HID],
         b_hh[:, 2 * HID:3 * HID]], axis=1)                 # (1, 4H)

    # fc weight pre-transposed and padded 32 -> 128 lanes (unmasked stores).
    w_fc_pad = jnp.zeros((HID, VOCAB_PAD), jnp.float32).at[:, :VOCAB].set(
        params["w_fc"].T)
    b_fc_pad = jnp.zeros((1, VOCAB_PAD), jnp.float32).at[:, :VOCAB].set(
        params["b_fc"])

    vmem = pl.BlockSpec(memory_space=pltpu.MemorySpace.VMEM)
    logits_pad, h_out = pl.pallas_call(
        _decoder_kernel,
        out_shape=(
            jax.ShapeDtypeStruct((T_OUT, BATCH, VOCAB_PAD), jnp.float32),
            jax.ShapeDtypeStruct((1, BATCH, HID), jnp.float32),
        ),
        in_specs=[vmem] * 9,
        out_specs=(vmem, vmem),
        scratch_shapes=[
            pltpu.VMEM((T_OUT, BATCH, G4), jnp.float32),    # gx
            pltpu.VMEM((T_OUT, BATCH, HID), jnp.float32),   # per-step h
        ],
    )(tokens_emb, enc_out, h0, w_e4, w_c4, w_h4, b4, w_fc_pad, b_fc_pad)
    # Slice the real vocab columns back out (padding is zeros).
    return logits_pad[:, :, :VOCAB], h_out


# ---------------------------------------------------------------------------
# Pure-JAX reference (mirrors the PyTorch forward step by step).
# ---------------------------------------------------------------------------
def reference_forward(tokens, enc_out, h0, params):
    h = h0[0]
    outs = []
    for t in range(tokens.shape[0]):
        x_emb = params["emb"][tokens[t]]                       # (B, E)
        scores = jnp.einsum("tbh,bh->tb", enc_out, h)
        w = jax.nn.softmax(scores, axis=0)
        ctx = jnp.einsum("tb,tbh->bh", w, enc_out)
        x = jnp.concatenate([x_emb, ctx], axis=-1)             # (B, E+H)
        gi = x @ params["w_ih"].T + params["b_ih"]
        gh = h @ params["w_hh"].T + params["b_hh"]
        r = jax.nn.sigmoid(gi[:, :HID] + gh[:, :HID])
        z = jax.nn.sigmoid(gi[:, HID:2 * HID] + gh[:, HID:2 * HID])
        n = jnp.tanh(gi[:, 2 * HID:] + r * gh[:, 2 * HID:])
        h = (1.0 - z) * n + z * h
        outs.append(h @ params["w_fc"].T + params["b_fc"])
    return jnp.stack(outs), h[None]


# ---------------------------------------------------------------------------
# Main.
# ---------------------------------------------------------------------------
if __name__ == "__main__":
    key = jax.random.PRNGKey(0)
    keys = jax.random.split(key, 10)

    scale = 0.1
    params = {
        "emb":  scale * jax.random.normal(keys[0], (VOCAB, EMB), jnp.float32),
        "w_ih": scale * jax.random.normal(keys[1], (3 * HID, INPUT_SIZE), jnp.float32),
        "w_hh": scale * jax.random.normal(keys[2], (3 * HID, HID), jnp.float32),
        "b_ih": scale * jax.random.normal(keys[3], (1, 3 * HID), jnp.float32),
        "b_hh": scale * jax.random.normal(keys[4], (1, 3 * HID), jnp.float32),
        "w_fc": scale * jax.random.normal(keys[5], (VOCAB, HID), jnp.float32),
        "b_fc": scale * jax.random.normal(keys[6], (1, VOCAB), jnp.float32),
    }

    # Module-level inputs (matching the PyTorch forward signature).
    input_batch = jax.random.randint(keys[7], (T_ENC, BATCH), 0, VOCAB)     # (L, B)
    target_batch = jax.random.randint(keys[8], (T_TGT, BATCH), 0, VOCAB)    # (L, B)
    encoder_hidden_state = scale * jax.random.normal(
        keys[9], (NUM_LAYERS, BATCH, HID), jnp.float32)
    encoder_output = scale * jax.random.normal(
        jax.random.fold_in(key, 99), (T_ENC, BATCH, HID), jnp.float32)

    # Teacher-forced decoder-input token sequence:
    #   step 0 uses input_batch[0], steps 1..T-2 use target_batch[1..T-2].
    tokens = jnp.concatenate([input_batch[0:1], target_batch[1:T_TGT - 1]], axis=0)
    # Embedding lookup (integer gather) stays as JAX glue before the kernel.
    tokens_emb = params["emb"][tokens]                                       # (T_OUT, B, E)

    logits, h_final = attention_decoder_forward(
        tokens_emb, encoder_output, encoder_hidden_state, params)
    logits = jax.block_until_ready(logits)
    h_final = jax.block_until_ready(h_final)

    ref_logits, ref_h = reference_forward(
        tokens, encoder_output, encoder_hidden_state, params)

    assert logits.shape == (T_OUT, BATCH, VOCAB)
    assert h_final.shape == (NUM_LAYERS, BATCH, HID)
    # Tolerance 1e-3: the only intended deviation from the reference is the
    # EUP approximate reciprocal in the softmax denominator.
    assert jnp.allclose(logits, ref_logits, atol=1e-3, rtol=1e-3)
    assert jnp.allclose(h_final, ref_h, atol=1e-3, rtol=1e-3)

    print("KERNEL_OK")
</pallas_src>

<mosaic_0001>
module attributes {stable_mosaic.version = 11 : i64} {
  func.func @_decoder_kernel(%arg0: memref<7x8x32xf32, #tpu.memory_space<vmem>>, %arg1: memref<8x8x32xf32, #tpu.memory_space<vmem>>, %arg2: memref<1x8x32xf32, #tpu.memory_space<vmem>>, %arg3: memref<32x128xf32, #tpu.memory_space<vmem>>, %arg4: memref<32x128xf32, #tpu.memory_space<vmem>>, %arg5: memref<32x128xf32, #tpu.memory_space<vmem>>, %arg6: memref<1x128xf32, #tpu.memory_space<vmem>>, %arg7: memref<32x128xf32, #tpu.memory_space<vmem>>, %arg8: memref<1x128xf32, #tpu.memory_space<vmem>>, %arg9: memref<7x8x128xf32, #tpu.memory_space<vmem>>, %arg10: memref<1x8x32xf32, #tpu.memory_space<vmem>>, %arg11: memref<7x8x128xf32, #tpu.memory_space<vmem>>, %arg12: memref<7x8x32xf32, #tpu.memory_space<vmem>>) attributes {dimension_semantics = [], scalar_prefetch = 0 : i64, scratch_operands = 2 : i64, tpu.core_type = #tpu.core_type<tc>} {
    %c0 = arith.constant 0 : index
    %c0_0 = arith.constant 0 : index
    %c0_1 = arith.constant 0 : index
    %0 = vector.load %arg1[%c0, %c0_0, %c0_1] : memref<8x8x32xf32, #tpu.memory_space<vmem>>, vector<8x8x32xf32>
    %c0_2 = arith.constant 0 : index
    %c0_3 = arith.constant 0 : index
    %c0_4 = arith.constant 0 : index
    %1 = vector.load %arg0[%c0_2, %c0_3, %c0_4] : memref<7x8x32xf32, #tpu.memory_space<vmem>>, vector<7x8x32xf32>
    %2 = vector.shape_cast %1 : vector<7x8x32xf32> to vector<56x32xf32>
    %c0_5 = arith.constant 0 : index
    %c0_6 = arith.constant 0 : index
    %3 = vector.load %arg3[%c0_5, %c0_6] : memref<32x128xf32, #tpu.memory_space<vmem>>, vector<32x128xf32>
    %cst = arith.constant dense<0.000000e+00> : vector<56x128xf32>
    %4 = tpu.matmul %2, %3, %cst {dimension_numbers = #tpu.dot_dimension_numbers<[1], [0], [0], [1], [0, 0, 1, 1], [], []>} : vector<56x32xf32>, vector<32x128xf32>, vector<56x128xf32> -> vector<56x128xf32>
    %c0_7 = arith.constant 0 : index
    %c0_8 = arith.constant 0 : index
    %5 = vector.load %arg6[%c0_7, %c0_8] : memref<1x128xf32, #tpu.memory_space<vmem>>, vector<1x128xf32>
    %6 = vector.broadcast %5 : vector<1x128xf32> to vector<56x128xf32>
    %7 = arith.addf %4, %6 : vector<56x128xf32>
    %8 = vector.shape_cast %7 : vector<56x128xf32> to vector<7x8x128xf32>
    %c0_9 = arith.constant 0 : index
    %c0_10 = arith.constant 0 : index
    %c0_11 = arith.constant 0 : index
    %9 = vector.load %arg11[%c0_9, %c0_10, %c0_11] : memref<7x8x128xf32, #tpu.memory_space<vmem>>, vector<7x8x128xf32>
    tpu.vector_store %arg11[%c0_9, %c0_10, %c0_11], %8 {strides = array<i32>} : memref<7x8x128xf32, #tpu.memory_space<vmem>>, vector<7x8x128xf32>,
    %c0_12 = arith.constant 0 : index
    %c0_13 = arith.constant 0 : index
    %c0_14 = arith.constant 0 : index
    %10 = vector.load %arg2[%c0_12, %c0_13, %c0_14] : memref<1x8x32xf32, #tpu.memory_space<vmem>>, vector<1x8x32xf32>
    %11 = vector.shape_cast %10 : vector<1x8x32xf32> to vector<8x32xf32>
    %c0_i32 = arith.constant 0 : i32
    %12 = vector.shape_cast %11 : vector<8x32xf32> to vector<1x8x32xf32>
    %13 = vector.broadcast %12 : vector<1x8x32xf32> to vector<8x8x32xf32>
    %14 = arith.mulf %0, %13 : vector<8x8x32xf32>
    %cst_15 = arith.constant dense<0.000000e+00> : vector<8x8xf32>
    %15 = vector.multi_reduction <add>, %14, %cst_15 [2] : vector<8x8x32xf32> to vector<8x8xf32>
    %16 = vector.shape_cast %15 : vector<8x8xf32> to vector<8x8x1xf32>
    %cst_16 = arith.constant dense<0xFF800000> : vector<8x1xf32>
    %17 = vector.multi_reduction <maximumf>, %16, %cst_16 [0] : vector<8x8x1xf32> to vector<8x1xf32>
    %18 = vector.shape_cast %17 : vector<8x1xf32> to vector<1x8x1xf32>
    %19 = vector.broadcast %18 : vector<1x8x1xf32> to vector<8x8x1xf32>
    %20 = arith.subf %16, %19 : vector<8x8x1xf32>
    %21 = math.exp %20 : vector<8x8x1xf32>
    %cst_17 = arith.constant dense<0.000000e+00> : vector<8x1xf32>
    %22 = vector.multi_reduction <add>, %21, %cst_17 [0] : vector<8x8x1xf32> to vector<8x1xf32>
    %23 = vector.shape_cast %22 : vector<8x1xf32> to vector<1x8x1xf32>
    %24 = tpu.reciprocal %23 {approx = true} : vector<1x8x1xf32> -> vector<1x8x1xf32>
    %25 = vector.broadcast %24 : vector<1x8x1xf32> to vector<8x8x1xf32>
    %26 = arith.mulf %21, %25 : vector<8x8x1xf32>
    %27 = vector.broadcast %26 : vector<8x8x1xf32> to vector<8x8x32xf32>
    %28 = arith.mulf %27, %0 : vector<8x8x32xf32>
    %cst_18 = arith.constant dense<0.000000e+00> : vector<8x32xf32>
    %29 = vector.multi_reduction <add>, %28, %cst_18 [0] : vector<8x8x32xf32> to vector<8x32xf32>
    %30 = arith.index_cast %c0_i32 : i32 to index
    %c0_19 = arith.constant 0 : index
    %c0_20 = arith.constant 0 : index
    %31 = vector.load %arg11[%30, %c0_19, %c0_20] : memref<7x8x128xf32, #tpu.memory_space<vmem>>, vector<1x8x128xf32>
    %32 = vector.shape_cast %31 : vector<1x8x128xf32> to vector<8x128xf32>
    %c0_21 = arith.constant 0 : index
    %c0_22 = arith.constant 0 : index
    %33 = vector.load %arg4[%c0_21, %c0_22] : memref<32x128xf32, #tpu.memory_space<vmem>>, vector<32x128xf32>
    %cst_23 = arith.constant dense<0.000000e+00> : vector<8x128xf32>
    %34 = tpu.matmul %29, %33, %cst_23 {dimension_numbers = #tpu.dot_dimension_numbers<[1], [0], [0], [1], [0, 0, 1, 1], [], []>} : vector<8x32xf32>, vector<32x128xf32>, vector<8x128xf32> -> vector<8x128xf32>
    %35 = arith.addf %32, %34 : vector<8x128xf32>
    %c0_24 = arith.constant 0 : index
    %c0_25 = arith.constant 0 : index
    %36 = vector.load %arg5[%c0_24, %c0_25] : memref<32x128xf32, #tpu.memory_space<vmem>>, vector<32x128xf32>
    %cst_26 = arith.constant dense<0.000000e+00> : vector<8x128xf32>
    %37 = tpu.matmul %11, %36, %cst_26 {dimension_numbers = #tpu.dot_dimension_numbers<[1], [0], [0], [1], [0, 0, 1, 1], [], []>} : vector<8x32xf32>, vector<32x128xf32>, vector<8x128xf32> -> vector<8x128xf32>
    %38 = arith.addf %35, %37 : vector<8x128xf32>
    %39 = vector.extract_strided_slice %38 {offsets = [0, 0], sizes = [8, 32], strides = [1, 1]} : vector<8x128xf32> to vector<8x32xf32>
    %40 = arith.negf %39 : vector<8x32xf32>
    %41 = math.exp %40 : vector<8x32xf32>
    %cst_27 = arith.constant 1.000000e+00 : f32
    %42 = vector.broadcast %cst_27 : f32 to vector<8x32xf32>
    %43 = arith.addf %42, %41 : vector<8x32xf32>
    %44 = arith.divf %42, %43 : vector<8x32xf32>
    %45 = vector.extract_strided_slice %38 {offsets = [0, 32], sizes = [8, 32], strides = [1, 1]} : vector<8x128xf32> to vector<8x32xf32>
    %46 = arith.negf %45 : vector<8x32xf32>
    %47 = math.exp %46 : vector<8x32xf32>
    %cst_28 = arith.constant 1.000000e+00 : f32
    %48 = vector.broadcast %cst_28 : f32 to vector<8x32xf32>
    %49 = arith.addf %48, %47 : vector<8x32xf32>
    %50 = arith.divf %48, %49 : vector<8x32xf32>
    %51 = vector.extract_strided_slice %38 {offsets = [0, 64], sizes = [8, 32], strides = [1, 1]} : vector<8x128xf32> to vector<8x32xf32>
    %52 = vector.extract_strided_slice %38 {offsets = [0, 96], sizes = [8, 32], strides = [1, 1]} : vector<8x128xf32> to vector<8x32xf32>
    %53 = arith.mulf %44, %52 : vector<8x32xf32>
    %54 = arith.addf %51, %53 : vector<8x32xf32>
    %55 = math.tanh %54 : vector<8x32xf32>
    %cst_29 = arith.constant 1.000000e+00 : f32
    %56 = vector.broadcast %cst_29 : f32 to vector<8x32xf32>
    %57 = arith.subf %56, %50 : vector<8x32xf32>
    %58 = arith.mulf %57, %55 : vector<8x32xf32>
    %59 = arith.mulf %50, %11 : vector<8x32xf32>
    %60 = arith.addf %58, %59 : vector<8x32xf32>
    %61 = arith.index_cast %c0_i32 : i32 to index
    %c0_30 = arith.constant 0 : index
    %c0_31 = arith.constant 0 : index
    %62 = vector.load %arg12[%61, %c0_30, %c0_31] : memref<7x8x32xf32, #tpu.memory_space<vmem>>, vector<1x8x32xf32>
    %63 = vector.shape_cast %62 : vector<1x8x32xf32> to vector<8x32xf32>
    %64 = vector.shape_cast %60 : vector<8x32xf32> to vector<1x8x32xf32>
    tpu.vector_store %arg12[%61, %c0_30, %c0_31], %64 {strides = array<i32>} : memref<7x8x32xf32, #tpu.memory_space<vmem>>, vector<1x8x32xf32>,
    %c1_i32 = arith.constant 1 : i32
    %65 = vector.shape_cast %60 : vector<8x32xf32> to vector<1x8x32xf32>
    %66 = vector.broadcast %65 : vector<1x8x32xf32> to vector<8x8x32xf32>
    %67 = arith.mulf %0, %66 : vector<8x8x32xf32>
    %cst_32 = arith.constant dense<0.000000e+00> : vector<8x8xf32>
    %68 = vector.multi_reduction <add>, %67, %cst_32 [2] : vector<8x8x32xf32> to vector<8x8xf32>
    %69 = vector.shape_cast %68 : vector<8x8xf32> to vector<8x8x1xf32>
    %cst_33 = arith.constant dense<0xFF800000> : vector<8x1xf32>
    %70 = vector.multi_reduction <maximumf>, %69, %cst_33 [0] : vector<8x8x1xf32> to vector<8x1xf32>
    %71 = vector.shape_cast %70 : vector<8x1xf32> to vector<1x8x1xf32>
    %72 = vector.broadcast %71 : vector<1x8x1xf32> to vector<8x8x1xf32>
    %73 = arith.subf %69, %72 : vector<8x8x1xf32>
    %74 = math.exp %73 : vector<8x8x1xf32>
    %cst_34 = arith.constant dense<0.000000e+00> : vector<8x1xf32>
    %75 = vector.multi_reduction <add>, %74, %cst_34 [0] : vector<8x8x1xf32> to vector<8x1xf32>
    %76 = vector.shape_cast %75 : vector<8x1xf32> to vector<1x8x1xf32>
    %77 = tpu.reciprocal %76 {approx = true} : vector<1x8x1xf32> -> vector<1x8x1xf32>
    %78 = vector.broadcast %77 : vector<1x8x1xf32> to vector<8x8x1xf32>
    %79 = arith.mulf %74, %78 : vector<8x8x1xf32>
    %80 = vector.broadcast %79 : vector<8x8x1xf32> to vector<8x8x32xf32>
    %81 = arith.mulf %80, %0 : vector<8x8x32xf32>
    %cst_35 = arith.constant dense<0.000000e+00> : vector<8x32xf32>
    %82 = vector.multi_reduction <add>, %81, %cst_35 [0] : vector<8x8x32xf32> to vector<8x32xf32>
    %83 = arith.index_cast %c1_i32 : i32 to index
    %c0_36 = arith.constant 0 : index
    %c0_37 = arith.constant 0 : index
    %84 = vector.load %arg11[%83, %c0_36, %c0_37] : memref<7x8x128xf32, #tpu.memory_space<vmem>>, vector<1x8x128xf32>
    %85 = vector.shape_cast %84 : vector<1x8x128xf32> to vector<8x128xf32>
    %c0_38 = arith.constant 0 : index
    %c0_39 = arith.constant 0 : index
    %86 = vector.load %arg4[%c0_38, %c0_39] : memref<32x128xf32, #tpu.memory_space<vmem>>, vector<32x128xf32>
    %cst_40 = arith.constant dense<0.000000e+00> : vector<8x128xf32>
    %87 = tpu.matmul %82, %86, %cst_40 {dimension_numbers = #tpu.dot_dimension_numbers<[1], [0], [0], [1], [0, 0, 1, 1], [], []>} : vector<8x32xf32>, vector<32x128xf32>, vector<8x128xf32> -> vector<8x128xf32>
    %88 = arith.addf %85, %87 : vector<8x128xf32>
    %c0_41 = arith.constant 0 : index
    %c0_42 = arith.constant 0 : index
    %89 = vector.load %arg5[%c0_41, %c0_42] : memref<32x128xf32, #tpu.memory_space<vmem>>, vector<32x128xf32>
    %cst_43 = arith.constant dense<0.000000e+00> : vector<8x128xf32>
    %90 = tpu.matmul %60, %89, %cst_43 {dimension_numbers = #tpu.dot_dimension_numbers<[1], [0], [0], [1], [0, 0, 1, 1], [], []>} : vector<8x32xf32>, vector<32x128xf32>, vector<8x128xf32> -> vector<8x128xf32>
    %91 = arith.addf %88, %90 : vector<8x128xf32>
    %92 = vector.extract_strided_slice %91 {offsets = [0, 0], sizes = [8, 32], strides = [1, 1]} : vector<8x128xf32> to vector<8x32xf32>
    %93 = arith.negf %92 : vector<8x32xf32>
    %94 = math.exp %93 : vector<8x32xf32>
    %cst_44 = arith.constant 1.000000e+00 : f32
    %95 = vector.broadcast %cst_44 : f32 to vector<8x32xf32>
    %96 = arith.addf %95, %94 : vector<8x32xf32>
    %97 = arith.divf %95, %96 : vector<8x32xf32>
    %98 = vector.extract_strided_slice %91 {offsets = [0, 32], sizes = [8, 32], strides = [1, 1]} : vector<8x128xf32> to vector<8x32xf32>
    %99 = arith.negf %98 : vector<8x32xf32>
    %100 = math.exp %99 : vector<8x32xf32>
    %cst_45 = arith.constant 1.000000e+00 : f32
    %101 = vector.broadcast %cst_45 : f32 to vector<8x32xf32>
    %102 = arith.addf %101, %100 : vector<8x32xf32>
    %103 = arith.divf %101, %102 : vector<8x32xf32>
    %104 = vector.extract_strided_slice %91 {offsets = [0, 64], sizes = [8, 32], strides = [1, 1]} : vector<8x128xf32> to vector<8x32xf32>
    %105 = vector.extract_strided_slice %91 {offsets = [0, 96], sizes = [8, 32], strides = [1, 1]} : vector<8x128xf32> to vector<8x32xf32>
    %106 = arith.mulf %97, %105 : vector<8x32xf32>
    %107 = arith.addf %104, %106 : vector<8x32xf32>
    %108 = math.tanh %107 : vector<8x32xf32>
    %cst_46 = arith.constant 1.000000e+00 : f32
    %109 = vector.broadcast %cst_46 : f32 to vector<8x32xf32>
    %110 = arith.subf %109, %103 : vector<8x32xf32>
    %111 = arith.mulf %110, %108 : vector<8x32xf32>
    %112 = arith.mulf %103, %60 : vector<8x32xf32>
    %113 = arith.addf %111, %112 : vector<8x32xf32>
    %114 = arith.index_cast %c1_i32 : i32 to index
    %c0_47 = arith.constant 0 : index
    %c0_48 = arith.constant 0 : index
    %115 = vector.load %arg12[%114, %c0_47, %c0_48] : memref<7x8x32xf32, #tpu.memory_space<vmem>>, vector<1x8x32xf32>
    %116 = vector.shape_cast %115 : vector<1x8x32xf32> to vector<8x32xf32>
    %117 = vector.shape_cast %113 : vector<8x32xf32> to vector<1x8x32xf32>
    tpu.vector_store %arg12[%114, %c0_47, %c0_48], %117 {strides = array<i32>} : memref<7x8x32xf32, #tpu.memory_space<vmem>>, vector<1x8x32xf32>,
    %c2_i32 = arith.constant 2 : i32
    %118 = vector.shape_cast %113 : vector<8x32xf32> to vector<1x8x32xf32>
    %119 = vector.broadcast %118 : vector<1x8x32xf32> to vector<8x8x32xf32>
    %120 = arith.mulf %0, %119 : vector<8x8x32xf32>
    %cst_49 = arith.constant dense<0.000000e+00> : vector<8x8xf32>
    %121 = vector.multi_reduction <add>, %120, %cst_49 [2] : vector<8x8x32xf32> to vector<8x8xf32>
    %122 = vector.shape_cast %121 : vector<8x8xf32> to vector<8x8x1xf32>
    %cst_50 = arith.constant dense<0xFF800000> : vector<8x1xf32>
    %123 = vector.multi_reduction <maximumf>, %122, %cst_50 [0] : vector<8x8x1xf32> to vector<8x1xf32>
    %124 = vector.shape_cast %123 : vector<8x1xf32> to vector<1x8x1xf32>
    %125 = vector.broadcast %124 : vector<1x8x1xf32> to vector<8x8x1xf32>
    %126 = arith.subf %122, %125 : vector<8x8x1xf32>
    %127 = math.exp %126 : vector<8x8x1xf32>
    %cst_51 = arith.constant dense<0.000000e+00> : vector<8x1xf32>
    %128 = vector.multi_reduction <add>, %127, %cst_51 [0] : vector<8x8x1xf32> to vector<8x1xf32>
    %129 = vector.shape_cast %128 : vector<8x1xf32> to vector<1x8x1xf32>
    %130 = tpu.reciprocal %129 {approx = true} : vector<1x8x1xf32> -> vector<1x8x1xf32>
    %131 = vector.broadcast %130 : vector<1x8x1xf32> to vector<8x8x1xf32>
    %132 = arith.mulf %127, %131 : vector<8x8x1xf32>
    %133 = vector.broadcast %132 : vector<8x8x1xf32> to vector<8x8x32xf32>
    %134 = arith.mulf %133, %0 : vector<8x8x32xf32>
    %cst_52 = arith.constant dense<0.000000e+00> : vector<8x32xf32>
    %135 = vector.multi_reduction <add>, %134, %cst_52 [0] : vector<8x8x32xf32> to vector<8x32xf32>
    %136 = arith.index_cast %c2_i32 : i32 to index
    %c0_53 = arith.constant 0 : index
    %c0_54 = arith.constant 0 : index
    %137 = vector.load %arg11[%136, %c0_53, %c0_54] : memref<7x8x128xf32, #tpu.memory_space<vmem>>, vector<1x8x128xf32>
    %138 = vector.shape_cast %137 : vector<1x8x128xf32> to vector<8x128xf32>
    %c0_55 = arith.constant 0 : index
    %c0_56 = arith.constant 0 : index
    %139 = vector.load %arg4[%c0_55, %c0_56] : memref<32x128xf32, #tpu.memory_space<vmem>>, vector<32x128xf32>
    %cst_57 = arith.constant dense<0.000000e+00> : vector<8x128xf32>
    %140 = tpu.matmul %135, %139, %cst_57 {dimension_numbers = #tpu.dot_dimension_numbers<[1], [0], [0], [1], [0, 0, 1, 1], [], []>} : vector<8x32xf32>, vector<32x128xf32>, vector<8x128xf32> -> vector<8x128xf32>
    %141 = arith.addf %138, %140 : vector<8x128xf32>
    %c0_58 = arith.constant 0 : index
    %c0_59 = arith.constant 0 : index
    %142 = vector.load %arg5[%c0_58, %c0_59] : memref<32x128xf32, #tpu.memory_space<vmem>>, vector<32x128xf32>
    %cst_60 = arith.constant dense<0.000000e+00> : vector<8x128xf32>
    %143 = tpu.matmul %113, %142, %cst_60 {dimension_numbers = #tpu.dot_dimension_numbers<[1], [0], [0], [1], [0, 0, 1, 1], [], []>} : vector<8x32xf32>, vector<32x128xf32>, vector<8x128xf32> -> vector<8x128xf32>
    %144 = arith.addf %141, %143 : vector<8x128xf32>
    %145 = vector.extract_strided_slice %144 {offsets = [0, 0], sizes = [8, 32], strides = [1, 1]} : vector<8x128xf32> to vector<8x32xf32>
    %146 = arith.negf %145 : vector<8x32xf32>
    %147 = math.exp %146 : vector<8x32xf32>
    %cst_61 = arith.constant 1.000000e+00 : f32
    %148 = vector.broadcast %cst_61 : f32 to vector<8x32xf32>
    %149 = arith.addf %148, %147 : vector<8x32xf32>
    %150 = arith.divf %148, %149 : vector<8x32xf32>
    %151 = vector.extract_strided_slice %144 {offsets = [0, 32], sizes = [8, 32], strides = [1, 1]} : vector<8x128xf32> to vector<8x32xf32>
    %152 = arith.negf %151 : vector<8x32xf32>
    %153 = math.exp %152 : vector<8x32xf32>
    %cst_62 = arith.constant 1.000000e+00 : f32
    %154 = vector.broadcast %cst_62 : f32 to vector<8x32xf32>
    %155 = arith.addf %154, %153 : vector<8x32xf32>
    %156 = arith.divf %154, %155 : vector<8x32xf32>
    %157 = vector.extract_strided_slice %144 {offsets = [0, 64], sizes = [8, 32], strides = [1, 1]} : vector<8x128xf32> to vector<8x32xf32>
    %158 = vector.extract_strided_slice %144 {offsets = [0, 96], sizes = [8, 32], strides = [1, 1]} : vector<8x128xf32> to vector<8x32xf32>
    %159 = arith.mulf %150, %158 : vector<8x32xf32>
    %160 = arith.addf %157, %159 : vector<8x32xf32>
    %161 = math.tanh %160 : vector<8x32xf32>
    %cst_63 = arith.constant 1.000000e+00 : f32
    %162 = vector.broadcast %cst_63 : f32 to vector<8x32xf32>
    %163 = arith.subf %162, %156 : vector<8x32xf32>
    %164 = arith.mulf %163, %161 : vector<8x32xf32>
    %165 = arith.mulf %156, %113 : vector<8x32xf32>
    %166 = arith.addf %164, %165 : vector<8x32xf32>
    %167 = arith.index_cast %c2_i32 : i32 to index
    %c0_64 = arith.constant 0 : index
    %c0_65 = arith.constant 0 : index
    %168 = vector.load %arg12[%167, %c0_64, %c0_65] : memref<7x8x32xf32, #tpu.memory_space<vmem>>, vector<1x8x32xf32>
    %169 = vector.shape_cast %168 : vector<1x8x32xf32> to vector<8x32xf32>
    %170 = vector.shape_cast %166 : vector<8x32xf32> to vector<1x8x32xf32>
    tpu.vector_store %arg12[%167, %c0_64, %c0_65], %170 {strides = array<i32>} : memref<7x8x32xf32, #tpu.memory_space<vmem>>, vector<1x8x32xf32>,
    %c3_i32 = arith.constant 3 : i32
    %171 = vector.shape_cast %166 : vector<8x32xf32> to vector<1x8x32xf32>
    %172 = vector.broadcast %171 : vector<1x8x32xf32> to vector<8x8x32xf32>
    %173 = arith.mulf %0, %172 : vector<8x8x32xf32>
    %cst_66 = arith.constant dense<0.000000e+00> : vector<8x8xf32>
    %174 = vector.multi_reduction <add>, %173, %cst_66 [2] : vector<8x8x32xf32> to vector<8x8xf32>
    %175 = vector.shape_cast %174 : vector<8x8xf32> to vector<8x8x1xf32>
    %cst_67 = arith.constant dense<0xFF800000> : vector<8x1xf32>
    %176 = vector.multi_reduction <maximumf>, %175, %cst_67 [0] : vector<8x8x1xf32> to vector<8x1xf32>
    %177 = vector.shape_cast %176 : vector<8x1xf32> to vector<1x8x1xf32>
    %178 = vector.broadcast %177 : vector<1x8x1xf32> to vector<8x8x1xf32>
    %179 = arith.subf %175, %178 : vector<8x8x1xf32>
    %180 = math.exp %179 : vector<8x8x1xf32>
    %cst_68 = arith.constant dense<0.000000e+00> : vector<8x1xf32>
    %181 = vector.multi_reduction <add>, %180, %cst_68 [0] : vector<8x8x1xf32> to vector<8x1xf32>
    %182 = vector.shape_cast %181 : vector<8x1xf32> to vector<1x8x1xf32>
    %183 = tpu.reciprocal %182 {approx = true} : vector<1x8x1xf32> -> vector<1x8x1xf32>
    %184 = vector.broadcast %183 : vector<1x8x1xf32> to vector<8x8x1xf32>
    %185 = arith.mulf %180, %184 : vector<8x8x1xf32>
    %186 = vector.broadcast %185 : vector<8x8x1xf32> to vector<8x8x32xf32>
    %187 = arith.mulf %186, %0 : vector<8x8x32xf32>
    %cst_69 = arith.constant dense<0.000000e+00> : vector<8x32xf32>
    %188 = vector.multi_reduction <add>, %187, %cst_69 [0] : vector<8x8x32xf32> to vector<8x32xf32>
    %189 = arith.index_cast %c3_i32 : i32 to index
    %c0_70 = arith.constant 0 : index
    %c0_71 = arith.constant 0 : index
    %190 = vector.load %arg11[%189, %c0_70, %c0_71] : memref<7x8x128xf32, #tpu.memory_space<vmem>>, vector<1x8x128xf32>
    %191 = vector.shape_cast %190 : vector<1x8x128xf32> to vector<8x128xf32>
    %c0_72 = arith.constant 0 : index
    %c0_73 = arith.constant 0 : index
    %192 = vector.load %arg4[%c0_72, %c0_73] : memref<32x128xf32, #tpu.memory_space<vmem>>, vector<32x128xf32>
    %cst_74 = arith.constant dense<0.000000e+00> : vector<8x128xf32>
    %193 = tpu.matmul %188, %192, %cst_74 {dimension_numbers = #tpu.dot_dimension_numbers<[1], [0], [0], [1], [0, 0, 1, 1], [], []>} : vector<8x32xf32>, vector<32x128xf32>, vector<8x128xf32> -> vector<8x128xf32>
    %194 = arith.addf %191, %193 : vector<8x128xf32>
    %c0_75 = arith.constant 0 : index
    %c0_76 = arith.constant 0 : index
    %195 = vector.load %arg5[%c0_75, %c0_76] : memref<32x128xf32, #tpu.memory_space<vmem>>, vector<32x128xf32>
    %cst_77 = arith.constant dense<0.000000e+00> : vector<8x128xf32>
    %196 = tpu.matmul %166, %195, %cst_77 {dimension_numbers = #tpu.dot_dimension_numbers<[1], [0], [0], [1], [0, 0, 1, 1], [], []>} : vector<8x32xf32>, vector<32x128xf32>, vector<8x128xf32> -> vector<8x128xf32>
    %197 = arith.addf %194, %196 : vector<8x128xf32>
    %198 = vector.extract_strided_slice %197 {offsets = [0, 0], sizes = [8, 32], strides = [1, 1]} : vector<8x128xf32> to vector<8x32xf32>
    %199 = arith.negf %198 : vector<8x32xf32>
    %200 = math.exp %199 : vector<8x32xf32>
    %cst_78 = arith.constant 1.000000e+00 : f32
    %201 = vector.broadcast %cst_78 : f32 to vector<8x32xf32>
    %202 = arith.addf %201, %200 : vector<8x32xf32>
    %203 = arith.divf %201, %202 : vector<8x32xf32>
    %204 = vector.extract_strided_slice %197 {offsets = [0, 32], sizes = [8, 32], strides = [1, 1]} : vector<8x128xf32> to vector<8x32xf32>
    %205 = arith.negf %204 : vector<8x32xf32>
    %206 = math.exp %205 : vector<8x32xf32>
    %cst_79 = arith.constant 1.000000e+00 : f32
    %207 = vector.broadcast %cst_79 : f32 to vector<8x32xf32>
    %208 = arith.addf %207, %206 : vector<8x32xf32>
    %209 = arith.divf %207, %208 : vector<8x32xf32>
    %210 = vector.extract_strided_slice %197 {offsets = [0, 64], sizes = [8, 32], strides = [1, 1]} : vector<8x128xf32> to vector<8x32xf32>
    %211 = vector.extract_strided_slice %197 {offsets = [0, 96], sizes = [8, 32], strides = [1, 1]} : vector<8x128xf32> to vector<8x32xf32>
    %212 = arith.mulf %203, %211 : vector<8x32xf32>
    %213 = arith.addf %210, %212 : vector<8x32xf32>
    %214 = math.tanh %213 : vector<8x32xf32>
    %cst_80 = arith.constant 1.000000e+00 : f32
    %215 = vector.broadcast %cst_80 : f32 to vector<8x32xf32>
    %216 = arith.subf %215, %209 : vector<8x32xf32>
    %217 = arith.mulf %216, %214 : vector<8x32xf32>
    %218 = arith.mulf %209, %166 : vector<8x32xf32>
    %219 = arith.addf %217, %218 : vector<8x32xf32>
    %220 = arith.index_cast %c3_i32 : i32 to index
    %c0_81 = arith.constant 0 : index
    %c0_82 = arith.constant 0 : index
    %221 = vector.load %arg12[%220, %c0_81, %c0_82] : memref<7x8x32xf32, #tpu.memory_space<vmem>>, vector<1x8x32xf32>
    %222 = vector.shape_cast %221 : vector<1x8x32xf32> to vector<8x32xf32>
    %223 = vector.shape_cast %219 : vector<8x32xf32> to vector<1x8x32xf32>
    tpu.vector_store %arg12[%220, %c0_81, %c0_82], %223 {strides = array<i32>} : memref<7x8x32xf32, #tpu.memory_space<vmem>>, vector<1x8x32xf32>,
    %c4_i32 = arith.constant 4 : i32
    %224 = vector.shape_cast %219 : vector<8x32xf32> to vector<1x8x32xf32>
    %225 = vector.broadcast %224 : vector<1x8x32xf32> to vector<8x8x32xf32>
    %226 = arith.mulf %0, %225 : vector<8x8x32xf32>
    %cst_83 = arith.constant dense<0.000000e+00> : vector<8x8xf32>
    %227 = vector.multi_reduction <add>, %226, %cst_83 [2] : vector<8x8x32xf32> to vector<8x8xf32>
    %228 = vector.shape_cast %227 : vector<8x8xf32> to vector<8x8x1xf32>
    %cst_84 = arith.constant dense<0xFF800000> : vector<8x1xf32>
    %229 = vector.multi_reduction <maximumf>, %228, %cst_84 [0] : vector<8x8x1xf32> to vector<8x1xf32>
    %230 = vector.shape_cast %229 : vector<8x1xf32> to vector<1x8x1xf32>
    %231 = vector.broadcast %230 : vector<1x8x1xf32> to vector<8x8x1xf32>
    %232 = arith.subf %228, %231 : vector<8x8x1xf32>
    %233 = math.exp %232 : vector<8x8x1xf32>
    %cst_85 = arith.constant dense<0.000000e+00> : vector<8x1xf32>
    %234 = vector.multi_reduction <add>, %233, %cst_85 [0] : vector<8x8x1xf32> to vector<8x1xf32>
    %235 = vector.shape_cast %234 : vector<8x1xf32> to vector<1x8x1xf32>
    %236 = tpu.reciprocal %235 {approx = true} : vector<1x8x1xf32> -> vector<1x8x1xf32>
    %237 = vector.broadcast %236 : vector<1x8x1xf32> to vector<8x8x1xf32>
    %238 = arith.mulf %233, %237 : vector<8x8x1xf32>
    %239 = vector.broadcast %238 : vector<8x8x1xf32> to vector<8x8x32xf32>
    %240 = arith.mulf %239, %0 : vector<8x8x32xf32>
    %cst_86 = arith.constant dense<0.000000e+00> : vector<8x32xf32>
    %241 = vector.multi_reduction <add>, %240, %cst_86 [0] : vector<8x8x32xf32> to vector<8x32xf32>
    %242 = arith.index_cast %c4_i32 : i32 to index
    %c0_87 = arith.constant 0 : index
    %c0_88 = arith.constant 0 : index
    %243 = vector.load %arg11[%242, %c0_87, %c0_88] : memref<7x8x128xf32, #tpu.memory_space<vmem>>, vector<1x8x128xf32>
    %244 = vector.shape_cast %243 : vector<1x8x128xf32> to vector<8x128xf32>
    %c0_89 = arith.constant 0 : index
    %c0_90 = arith.constant 0 : index
    %245 = vector.load %arg4[%c0_89, %c0_90] : memref<32x128xf32, #tpu.memory_space<vmem>>, vector<32x128xf32>
    %cst_91 = arith.constant dense<0.000000e+00> : vector<8x128xf32>
    %246 = tpu.matmul %241, %245, %cst_91 {dimension_numbers = #tpu.dot_dimension_numbers<[1], [0], [0], [1], [0, 0, 1, 1], [], []>} : vector<8x32xf32>, vector<32x128xf32>, vector<8x128xf32> -> vector<8x128xf32>
    %247 = arith.addf %244, %246 : vector<8x128xf32>
    %c0_92 = arith.constant 0 : index
    %c0_93 = arith.constant 0 : index
    %248 = vector.load %arg5[%c0_92, %c0_93] : memref<32x128xf32, #tpu.memory_space<vmem>>, vector<32x128xf32>
    %cst_94 = arith.constant dense<0.000000e+00> : vector<8x128xf32>
    %249 = tpu.matmul %219, %248, %cst_94 {dimension_numbers = #tpu.dot_dimension_numbers<[1], [0], [0], [1], [0, 0, 1, 1], [], []>} : vector<8x32xf32>, vector<32x128xf32>, vector<8x128xf32> -> vector<8x128xf32>
    %250 = arith.addf %247, %249 : vector<8x128xf32>
    %251 = vector.extract_strided_slice %250 {offsets = [0, 0], sizes = [8, 32], strides = [1, 1]} : vector<8x128xf32> to vector<8x32xf32>
    %252 = arith.negf %251 : vector<8x32xf32>
    %253 = math.exp %252 : vector<8x32xf32>
    %cst_95 = arith.constant 1.000000e+00 : f32
    %254 = vector.broadcast %cst_95 : f32 to vector<8x32xf32>
    %255 = arith.addf %254, %253 : vector<8x32xf32>
    %256 = arith.divf %254, %255 : vector<8x32xf32>
    %257 = vector.extract_strided_slice %250 {offsets = [0, 32], sizes = [8, 32], strides = [1, 1]} : vector<8x128xf32> to vector<8x32xf32>
    %258 = arith.negf %257 : vector<8x32xf32>
    %259 = math.exp %258 : vector<8x32xf32>
    %cst_96 = arith.constant 1.000000e+00 : f32
    %260 = vector.broadcast %cst_96 : f32 to vector<8x32xf32>
    %261 = arith.addf %260, %259 : vector<8x32xf32>
    %262 = arith.divf %260, %261 : vector<8x32xf32>
    %263 = vector.extract_strided_slice %250 {offsets = [0, 64], sizes = [8, 32], strides = [1, 1]} : vector<8x128xf32> to vector<8x32xf32>
    %264 = vector.extract_strided_slice %250 {offsets = [0, 96], sizes = [8, 32], strides = [1, 1]} : vector<8x128xf32> to vector<8x32xf32>
    %265 = arith.mulf %256, %264 : vector<8x32xf32>
    %266 = arith.addf %263, %265 : vector<8x32xf32>
    %267 = math.tanh %266 : vector<8x32xf32>
    %cst_97 = arith.constant 1.000000e+00 : f32
    %268 = vector.broadcast %cst_97 : f32 to vector<8x32xf32>
    %269 = arith.subf %268, %262 : vector<8x32xf32>
    %270 = arith.mulf %269, %267 : vector<8x32xf32>
    %271 = arith.mulf %262, %219 : vector<8x32xf32>
    %272 = arith.addf %270, %271 : vector<8x32xf32>
    %273 = arith.index_cast %c4_i32 : i32 to index
    %c0_98 = arith.constant 0 : index
    %c0_99 = arith.constant 0 : index
    %274 = vector.load %arg12[%273, %c0_98, %c0_99] : memref<7x8x32xf32, #tpu.memory_space<vmem>>, vector<1x8x32xf32>
    %275 = vector.shape_cast %274 : vector<1x8x32xf32> to vector<8x32xf32>
    %276 = vector.shape_cast %272 : vector<8x32xf32> to vector<1x8x32xf32>
    tpu.vector_store %arg12[%273, %c0_98, %c0_99], %276 {strides = array<i32>} : memref<7x8x32xf32, #tpu.memory_space<vmem>>, vector<1x8x32xf32>,
    %c5_i32 = arith.constant 5 : i32
    %277 = vector.shape_cast %272 : vector<8x32xf32> to vector<1x8x32xf32>
    %278 = vector.broadcast %277 : vector<1x8x32xf32> to vector<8x8x32xf32>
    %279 = arith.mulf %0, %278 : vector<8x8x32xf32>
    %cst_100 = arith.constant dense<0.000000e+00> : vector<8x8xf32>
    %280 = vector.multi_reduction <add>, %279, %cst_100 [2] : vector<8x8x32xf32> to vector<8x8xf32>
    %281 = vector.shape_cast %280 : vector<8x8xf32> to vector<8x8x1xf32>
    %cst_101 = arith.constant dense<0xFF800000> : vector<8x1xf32>
    %282 = vector.multi_reduction <maximumf>, %281, %cst_101 [0] : vector<8x8x1xf32> to vector<8x1xf32>
    %283 = vector.shape_cast %282 : vector<8x1xf32> to vector<1x8x1xf32>
    %284 = vector.broadcast %283 : vector<1x8x1xf32> to vector<8x8x1xf32>
    %285 = arith.subf %281, %284 : vector<8x8x1xf32>
    %286 = math.exp %285 : vector<8x8x1xf32>
    %cst_102 = arith.constant dense<0.000000e+00> : vector<8x1xf32>
    %287 = vector.multi_reduction <add>, %286, %cst_102 [0] : vector<8x8x1xf32> to vector<8x1xf32>
    %288 = vector.shape_cast %287 : vector<8x1xf32> to vector<1x8x1xf32>
    %289 = tpu.reciprocal %288 {approx = true} : vector<1x8x1xf32> -> vector<1x8x1xf32>
    %290 = vector.broadcast %289 : vector<1x8x1xf32> to vector<8x8x1xf32>
    %291 = arith.mulf %286, %290 : vector<8x8x1xf32>
    %292 = vector.broadcast %291 : vector<8x8x1xf32> to vector<8x8x32xf32>
    %293 = arith.mulf %292, %0 : vector<8x8x32xf32>
    %cst_103 = arith.constant dense<0.000000e+00> : vector<8x32xf32>
    %294 = vector.multi_reduction <add>, %293, %cst_103 [0] : vector<8x8x32xf32> to vector<8x32xf32>
    %295 = arith.index_cast %c5_i32 : i32 to index
    %c0_104 = arith.constant 0 : index
    %c0_105 = arith.constant 0 : index
    %296 = vector.load %arg11[%295, %c0_104, %c0_105] : memref<7x8x128xf32, #tpu.memory_space<vmem>>, vector<1x8x128xf32>
    %297 = vector.shape_cast %296 : vector<1x8x128xf32> to vector<8x128xf32>
    %c0_106 = arith.constant 0 : index
    %c0_107 = arith.constant 0 : index
    %298 = vector.load %arg4[%c0_106, %c0_107] : memref<32x128xf32, #tpu.memory_space<vmem>>, vector<32x128xf32>
    %cst_108 = arith.constant dense<0.000000e+00> : vector<8x128xf32>
    %299 = tpu.matmul %294, %298, %cst_108 {dimension_numbers = #tpu.dot_dimension_numbers<[1], [0], [0], [1], [0, 0, 1, 1], [], []>} : vector<8x32xf32>, vector<32x128xf32>, vector<8x128xf32> -> vector<8x128xf32>
    %300 = arith.addf %297, %299 : vector<8x128xf32>
    %c0_109 = arith.constant 0 : index
    %c0_110 = arith.constant 0 : index
    %301 = vector.load %arg5[%c0_109, %c0_110] : memref<32x128xf32, #tpu.memory_space<vmem>>, vector<32x128xf32>
    %cst_111 = arith.constant dense<0.000000e+00> : vector<8x128xf32>
    %302 = tpu.matmul %272, %301, %cst_111 {dimension_numbers = #tpu.dot_dimension_numbers<[1], [0], [0], [1], [0, 0, 1, 1], [], []>} : vector<8x32xf32>, vector<32x128xf32>, vector<8x128xf32> -> vector<8x128xf32>
    %303 = arith.addf %300, %302 : vector<8x128xf32>
    %304 = vector.extract_strided_slice %303 {offsets = [0, 0], sizes = [8, 32], strides = [1, 1]} : vector<8x128xf32> to vector<8x32xf32>
    %305 = arith.negf %304 : vector<8x32xf32>
    %306 = math.exp %305 : vector<8x32xf32>
    %cst_112 = arith.constant 1.000000e+00 : f32
    %307 = vector.broadcast %cst_112 : f32 to vector<8x32xf32>
    %308 = arith.addf %307, %306 : vector<8x32xf32>
    %309 = arith.divf %307, %308 : vector<8x32xf32>
    %310 = vector.extract_strided_slice %303 {offsets = [0, 32], sizes = [8, 32], strides = [1, 1]} : vector<8x128xf32> to vector<8x32xf32>
    %311 = arith.negf %310 : vector<8x32xf32>
    %312 = math.exp %311 : vector<8x32xf32>
    %cst_113 = arith.constant 1.000000e+00 : f32
    %313 = vector.broadcast %cst_113 : f32 to vector<8x32xf32>
    %314 = arith.addf %313, %312 : vector<8x32xf32>
    %315 = arith.divf %313, %314 : vector<8x32xf32>
    %316 = vector.extract_strided_slice %303 {offsets = [0, 64], sizes = [8, 32], strides = [1, 1]} : vector<8x128xf32> to vector<8x32xf32>
    %317 = vector.extract_strided_slice %303 {offsets = [0, 96], sizes = [8, 32], strides = [1, 1]} : vector<8x128xf32> to vector<8x32xf32>
    %318 = arith.mulf %309, %317 : vector<8x32xf32>
    %319 = arith.addf %316, %318 : vector<8x32xf32>
    %320 = math.tanh %319 : vector<8x32xf32>
    %cst_114 = arith.constant 1.000000e+00 : f32
    %321 = vector.broadcast %cst_114 : f32 to vector<8x32xf32>
    %322 = arith.subf %321, %315 : vector<8x32xf32>
    %323 = arith.mulf %322, %320 : vector<8x32xf32>
    %324 = arith.mulf %315, %272 : vector<8x32xf32>
    %325 = arith.addf %323, %324 : vector<8x32xf32>
    %326 = arith.index_cast %c5_i32 : i32 to index
    %c0_115 = arith.constant 0 : index
    %c0_116 = arith.constant 0 : index
    %327 = vector.load %arg12[%326, %c0_115, %c0_116] : memref<7x8x32xf32, #tpu.memory_space<vmem>>, vector<1x8x32xf32>
    %328 = vector.shape_cast %327 : vector<1x8x32xf32> to vector<8x32xf32>
    %329 = vector.shape_cast %325 : vector<8x32xf32> to vector<1x8x32xf32>
    tpu.vector_store %arg12[%326, %c0_115, %c0_116], %329 {strides = array<i32>} : memref<7x8x32xf32, #tpu.memory_space<vmem>>, vector<1x8x32xf32>,
    %c6_i32 = arith.constant 6 : i32
    %330 = vector.shape_cast %325 : vector<8x32xf32> to vector<1x8x32xf32>
    %331 = vector.broadcast %330 : vector<1x8x32xf32> to vector<8x8x32xf32>
    %332 = arith.mulf %0, %331 : vector<8x8x32xf32>
    %cst_117 = arith.constant dense<0.000000e+00> : vector<8x8xf32>
    %333 = vector.multi_reduction <add>, %332, %cst_117 [2] : vector<8x8x32xf32> to vector<8x8xf32>
    %334 = vector.shape_cast %333 : vector<8x8xf32> to vector<8x8x1xf32>
    %cst_118 = arith.constant dense<0xFF800000> : vector<8x1xf32>
    %335 = vector.multi_reduction <maximumf>, %334, %cst_118 [0] : vector<8x8x1xf32> to vector<8x1xf32>
    %336 = vector.shape_cast %335 : vector<8x1xf32> to vector<1x8x1xf32>
    %337 = vector.broadcast %336 : vector<1x8x1xf32> to vector<8x8x1xf32>
    %338 = arith.subf %334, %337 : vector<8x8x1xf32>
    %339 = math.exp %338 : vector<8x8x1xf32>
    %cst_119 = arith.constant dense<0.000000e+00> : vector<8x1xf32>
    %340 = vector.multi_reduction <add>, %339, %cst_119 [0] : vector<8x8x1xf32> to vector<8x1xf32>
    %341 = vector.shape_cast %340 : vector<8x1xf32> to vector<1x8x1xf32>
    %342 = tpu.reciprocal %341 {approx = true} : vector<1x8x1xf32> -> vector<1x8x1xf32>
    %343 = vector.broadcast %342 : vector<1x8x1xf32> to vector<8x8x1xf32>
    %344 = arith.mulf %339, %343 : vector<8x8x1xf32>
    %345 = vector.broadcast %344 : vector<8x8x1xf32> to vector<8x8x32xf32>
    %346 = arith.mulf %345, %0 : vector<8x8x32xf32>
    %cst_120 = arith.constant dense<0.000000e+00> : vector<8x32xf32>
    %347 = vector.multi_reduction <add>, %346, %cst_120 [0] : vector<8x8x32xf32> to vector<8x32xf32>
    %348 = arith.index_cast %c6_i32 : i32 to index
    %c0_121 = arith.constant 0 : index
    %c0_122 = arith.constant 0 : index
    %349 = vector.load %arg11[%348, %c0_121, %c0_122] : memref<7x8x128xf32, #tpu.memory_space<vmem>>, vector<1x8x128xf32>
    %350 = vector.shape_cast %349 : vector<1x8x128xf32> to vector<8x128xf32>
    %c0_123 = arith.constant 0 : index
    %c0_124 = arith.constant 0 : index
    %351 = vector.load %arg4[%c0_123, %c0_124] : memref<32x128xf32, #tpu.memory_space<vmem>>, vector<32x128xf32>
    %cst_125 = arith.constant dense<0.000000e+00> : vector<8x128xf32>
    %352 = tpu.matmul %347, %351, %cst_125 {dimension_numbers = #tpu.dot_dimension_numbers<[1], [0], [0], [1], [0, 0, 1, 1], [], []>} : vector<8x32xf32>, vector<32x128xf32>, vector<8x128xf32> -> vector<8x128xf32>
    %353 = arith.addf %350, %352 : vector<8x128xf32>
    %c0_126 = arith.constant 0 : index
    %c0_127 = arith.constant 0 : index
    %354 = vector.load %arg5[%c0_126, %c0_127] : memref<32x128xf32, #tpu.memory_space<vmem>>, vector<32x128xf32>
    %cst_128 = arith.constant dense<0.000000e+00> : vector<8x128xf32>
    %355 = tpu.matmul %325, %354, %cst_128 {dimension_numbers = #tpu.dot_dimension_numbers<[1], [0], [0], [1], [0, 0, 1, 1], [], []>} : vector<8x32xf32>, vector<32x128xf32>, vector<8x128xf32> -> vector<8x128xf32>
    %356 = arith.addf %353, %355 : vector<8x128xf32>
    %357 = vector.extract_strided_slice %356 {offsets = [0, 0], sizes = [8, 32], strides = [1, 1]} : vector<8x128xf32> to vector<8x32xf32>
    %358 = arith.negf %357 : vector<8x32xf32>
    %359 = math.exp %358 : vector<8x32xf32>
    %cst_129 = arith.constant 1.000000e+00 : f32
    %360 = vector.broadcast %cst_129 : f32 to vector<8x32xf32>
    %361 = arith.addf %360, %359 : vector<8x32xf32>
    %362 = arith.divf %360, %361 : vector<8x32xf32>
    %363 = vector.extract_strided_slice %356 {offsets = [0, 32], sizes = [8, 32], strides = [1, 1]} : vector<8x128xf32> to vector<8x32xf32>
    %364 = arith.negf %363 : vector<8x32xf32>
    %365 = math.exp %364 : vector<8x32xf32>
    %cst_130 = arith.constant 1.000000e+00 : f32
    %366 = vector.broadcast %cst_130 : f32 to vector<8x32xf32>
    %367 = arith.addf %366, %365 : vector<8x32xf32>
    %368 = arith.divf %366, %367 : vector<8x32xf32>
    %369 = vector.extract_strided_slice %356 {offsets = [0, 64], sizes = [8, 32], strides = [1, 1]} : vector<8x128xf32> to vector<8x32xf32>
    %370 = vector.extract_strided_slice %356 {offsets = [0, 96], sizes = [8, 32], strides = [1, 1]} : vector<8x128xf32> to vector<8x32xf32>
    %371 = arith.mulf %362, %370 : vector<8x32xf32>
    %372 = arith.addf %369, %371 : vector<8x32xf32>
    %373 = math.tanh %372 : vector<8x32xf32>
    %cst_131 = arith.constant 1.000000e+00 : f32
    %374 = vector.broadcast %cst_131 : f32 to vector<8x32xf32>
    %375 = arith.subf %374, %368 : vector<8x32xf32>
    %376 = arith.mulf %375, %373 : vector<8x32xf32>
    %377 = arith.mulf %368, %325 : vector<8x32xf32>
    %378 = arith.addf %376, %377 : vector<8x32xf32>
    %379 = arith.index_cast %c6_i32 : i32 to index
    %c0_132 = arith.constant 0 : index
    %c0_133 = arith.constant 0 : index
    %380 = vector.load %arg12[%379, %c0_132, %c0_133] : memref<7x8x32xf32, #tpu.memory_space<vmem>>, vector<1x8x32xf32>
    %381 = vector.shape_cast %380 : vector<1x8x32xf32> to vector<8x32xf32>
    %382 = vector.shape_cast %378 : vector<8x32xf32> to vector<1x8x32xf32>
    tpu.vector_store %arg12[%379, %c0_132, %c0_133], %382 {strides = array<i32>} : memref<7x8x32xf32, #tpu.memory_space<vmem>>, vector<1x8x32xf32>,
    %c7_i32 = arith.constant 7 : i32
    %c0_134 = arith.constant 0 : index
    %c0_135 = arith.constant 0 : index
    %c0_136 = arith.constant 0 : index
    %383 = vector.load %arg10[%c0_134, %c0_135, %c0_136] : memref<1x8x32xf32, #tpu.memory_space<vmem>>, vector<1x8x32xf32>
    %384 = vector.shape_cast %383 : vector<1x8x32xf32> to vector<8x32xf32>
    %385 = vector.shape_cast %378 : vector<8x32xf32> to vector<1x8x32xf32>
    tpu.vector_store %arg10[%c0_134, %c0_135, %c0_136], %385 {strides = array<i32>} : memref<1x8x32xf32, #tpu.memory_space<vmem>>, vector<1x8x32xf32>,
    %c0_137 = arith.constant 0 : index
    %c0_138 = arith.constant 0 : index
    %c0_139 = arith.constant 0 : index
    %386 = vector.load %arg12[%c0_137, %c0_138, %c0_139] : memref<7x8x32xf32, #tpu.memory_space<vmem>>, vector<7x8x32xf32>
    %387 = vector.shape_cast %386 : vector<7x8x32xf32> to vector<56x32xf32>
    %c0_140 = arith.constant 0 : index
    %c0_141 = arith.constant 0 : index
    %388 = vector.load %arg7[%c0_140, %c0_141] : memref<32x128xf32, #tpu.memory_space<vmem>>, vector<32x128xf32>
    %cst_142 = arith.constant dense<0.000000e+00> : vector<56x128xf32>
    %389 = tpu.matmul %387, %388, %cst_142 {dimension_numbers = #tpu.dot_dimension_numbers<[1], [0], [0], [1], [0, 0, 1, 1], [], []>} : vector<56x32xf32>, vector<32x128xf32>, vector<56x128xf32> -> vector<56x128xf32>
    %c0_143 = arith.constant 0 : index
    %c0_144 = arith.constant 0 : index
    %390 = vector.load %arg8[%c0_143, %c0_144] : memref<1x128xf32, #tpu.memory_space<vmem>>, vector<1x128xf32>
    %391 = vector.broadcast %390 : vector<1x128xf32> to vector<56x128xf32>
    %392 = arith.addf %389, %391 : vector<56x128xf32>
    %393 = vector.shape_cast %392 : vector<56x128xf32> to vector<7x8x128xf32>
    %c0_145 = arith.constant 0 : index
    %c0_146 = arith.constant 0 : index
    %c0_147 = arith.constant 0 : index
    %394 = vector.load %arg9[%c0_145, %c0_146, %c0_147] : memref<7x8x128xf32, #tpu.memory_space<vmem>>, vector<7x8x128xf32>
    tpu.vector_store %arg9[%c0_145, %c0_146, %c0_147], %393 {strides = array<i32>} : memref<7x8x128xf32, #tpu.memory_space<vmem>>, vector<7x8x128xf32>,
    return
  }
}

</mosaic_0001>

<llo_original>
// kernel: attention_decoder_forward.1
$region0: #{attention_decoder_forward.1}
  #allocation0 [shape = 'u32[]', space=smem, size = 0x4, offset = 0x4, fixed_abs, tag = 'smem constant byte address 0x4 - core index']
  #allocation1 [shape = 'u32[72,128]{1,0:T(1,128)}', space=vmem, size = 0x9000, scoped, tag = 'internal scratch']
  #allocation2 [shape = 'f32[7,8,128]{2,1,0:T(8,128)}', space=vmem, size = 0x7000, scoped, tag = 'scratch operand']
  #allocation3 [shape = 'f32[7,8,32]{2,1,0:T(8,128)}', space=vmem, size = 0x7000, scoped, tag = 'scratch operand']
  %s0 = inlined_call_operand.vmem [shape: f32[7,8,32], index: 0, kind: input, shape index: {}]
  %s1 = inlined_call_operand.vmem [shape: f32[8,8,32], index: 1, kind: input, shape index: {}]
  %s2 = inlined_call_operand.vmem [shape: f32[1,8,32], index: 2, kind: input, shape index: {}]
  %s3 = inlined_call_operand.vmem [shape: f32[32,128], index: 3, kind: input, shape index: {}]
  %s4 = inlined_call_operand.vmem [shape: f32[32,128], index: 4, kind: input, shape index: {}]
  %s5 = inlined_call_operand.vmem [shape: f32[32,128], index: 5, kind: input, shape index: {}]
  %s6 = inlined_call_operand.vmem [shape: f32[1,128], index: 6, kind: input, shape index: {}]
  %s7 = inlined_call_operand.vmem [shape: f32[32,128], index: 7, kind: input, shape index: {}]
  %s8 = inlined_call_operand.vmem [shape: f32[1,128], index: 8, kind: input, shape index: {}]
  %s9 = inlined_call_operand.hbm [shape: f32[7,8,128], index: 9, kind: output, shape index: {0}]
  %s10 = inlined_call_operand.hbm [shape: f32[1,8,32], index: 10, kind: output, shape index: {1}]
  %11 = xla_tuple %s9, %s10
  %s12 = sld [smem:[#allocation0]]
  $region54: #{attention_decoder_forward.1} parent=0
    _
  %s14 = ssub.s32 1, %s12
  %s15 = scalar_select 0, %s14, %s12
  $region1: #{attention_decoder_forward.1} parent=0
    #allocation4 [shape = 'u8[28672]{0}', space=vmem, size = 0x7000, scoped, tag = 'output window, operand 0, single buffered']
    #allocation5 [shape = 's32[1]{0}', space=sflag, size = 0x4, scoped, tag = 'scoped memory for attention_decoder_forward.1']
    #allocation6 [shape = 'u8[4096]{0}', space=vmem, size = 0x1000, scoped, tag = 'output window, operand 1, single buffered']
    #allocation7 [shape = 's32[1]{0}', space=sflag, size = 0x4, scoped, tag = 'scoped memory for attention_decoder_forward.1']
    %16 = vsyncpa [#allocation5], 0
    %17 = vsyncpa [#allocation7], 0
    // Predicated region
    $region2: #{attention_decoder_forward.1} parent=1 // pred_check
      _
    $region3: #{attention_decoder_forward.1} parent=1 // pred_check_branch
      %19 = sbr.rel (0) target = $region5
    $region4: #{attention_decoder_forward.1} parent=1 // pred_region
      _
    $region5: #{attention_decoder_forward.1} parent=1 // pred_fallthru
      _
    // Predicated region
    $region6: #{attention_decoder_forward.1} parent=1 // pred_check
      _
    $region7: #{attention_decoder_forward.1} parent=1 // pred_check_branch
      %21 = sbr.rel (0) target = $region9
    $region8: #{attention_decoder_forward.1} parent=1 // pred_region
      _
    $region9: #{attention_decoder_forward.1} parent=1 // pred_fallthru
      _
    // Predicated region
    $region10: #{attention_decoder_forward.1} parent=1 // pred_check
      _
    $region11: #{attention_decoder_forward.1} parent=1 // pred_check_branch
      %23 = sbr.rel (0) target = $region13
    $region12: #{attention_decoder_forward.1} parent=1 // pred_region
      _
    $region13: #{attention_decoder_forward.1} parent=1 // pred_fallthru
      _
    // Predicated region
    $region14: #{attention_decoder_forward.1} parent=1 // pred_check
      _
    $region15: #{attention_decoder_forward.1} parent=1 // pred_check_branch
      %25 = sbr.rel (0) target = $region17
    $region16: #{attention_decoder_forward.1} parent=1 // pred_region
      _
    $region17: #{attention_decoder_forward.1} parent=1 // pred_fallthru
      _
    // Predicated region
    $region18: #{attention_decoder_forward.1} parent=1 // pred_check
      _
    $region19: #{attention_decoder_forward.1} parent=1 // pred_check_branch
      %27 = sbr.rel (0) target = $region21
    $region20: #{attention_decoder_forward.1} parent=1 // pred_region
      _
    $region21: #{attention_decoder_forward.1} parent=1 // pred_fallthru
      _
    // Predicated region
    $region22: #{attention_decoder_forward.1} parent=1 // pred_check
      _
    $region23: #{attention_decoder_forward.1} parent=1 // pred_check_branch
      %29 = sbr.rel (0) target = $region25
    $region24: #{attention_decoder_forward.1} parent=1 // pred_region
      _
    $region25: #{attention_decoder_forward.1} parent=1 // pred_fallthru
      _
    // Predicated region
    $region26: #{attention_decoder_forward.1} parent=1 // pred_check
      _
    $region27: #{attention_decoder_forward.1} parent=1 // pred_check_branch
      %31 = sbr.rel (0) target = $region29
    $region28: #{attention_decoder_forward.1} parent=1 // pred_region
      _
    $region29: #{attention_decoder_forward.1} parent=1 // pred_fallthru
      _
    // Predicated region
    $region30: #{attention_decoder_forward.1} parent=1 // pred_check
      _
    $region31: #{attention_decoder_forward.1} parent=1 // pred_check_branch
      %33 = sbr.rel (0) target = $region33
    $region32: #{attention_decoder_forward.1} parent=1 // pred_region
      _
    $region33: #{attention_decoder_forward.1} parent=1 // pred_fallthru
      _
    // Predicated region
    $region34: #{attention_decoder_forward.1} parent=1 // pred_check
      _
    $region35: #{attention_decoder_forward.1} parent=1 // pred_check_branch
      %35 = sbr.rel (0) target = $region37
    $region36: #{attention_decoder_forward.1} parent=1 // pred_region
      _
    $region37: #{attention_decoder_forward.1} parent=1 // pred_fallthru
      _
    %v36 = vld [vmem:[%s1] sm:$0xff]
    %v37 = vld [vmem:[%s1 + $0x8] sm:$0xff]
    %v38 = vld [vmem:[%s1 + $0x10] sm:$0xff]
    %v39 = vld [vmem:[%s1 + $0x18] sm:$0xff]
    %v40 = vld [vmem:[%s1 + $0x20] sm:$0xff]
    %v41 = vld [vmem:[%s1 + $0x28] sm:$0xff]
    %v42 = vld [vmem:[%s1 + $0x30] sm:$0xff]
    %v43 = vld [vmem:[%s1 + $0x38] sm:$0xff]
    %v44 = vld [vmem:[%s0] sm:$0xff]
    %v45 = vld [vmem:[%s0 + $0x8] sm:$0xff]
    %v46 = vld [vmem:[%s0 + $0x10] sm:$0xff]
    %v47 = vld [vmem:[%s0 + $0x18] sm:$0xff]
    %v48 = vld [vmem:[%s0 + $0x20] sm:$0xff]
    %v49 = vld [vmem:[%s0 + $0x28] sm:$0xff]
    %v50 = vld [vmem:[%s0 + $0x30] sm:$0xff]
    %v51 = vld [vmem:[%s3] sm:$0xff]
    %v52 = vld [vmem:[%s3 + $0x8] sm:$0xff]
    %v53 = vld [vmem:[%s3 + $0x10] sm:$0xff]
    %v54 = vld [vmem:[%s3 + $0x18] sm:$0xff]
    %v55 = vld [vmem:[%s6] sm:$0x1]
    %v57 = vperm.slane %v55, 0
    %vm59 = vcmask 261120
    %v61 = vsel %vm59, %v44, 0
    %v64 = vsel %vm59, %v45, 0
    %v67 = vsel %vm59, %v46, 0
    %v70 = vsel %vm59, %v47, 0
    %v73 = vsel %vm59, %v48, 0
    %v76 = vsel %vm59, %v49, 0
    %v79 = vsel %vm59, %v50, 0
    %81 = vmatpush.msra.mxu0 0.0
    %82 = vmatpush.msra.mxu0 0.0
    %83 = vmatpush.msra.mxu0 0.0
    %84 = vmatpush.msra.mxu0 0.0
    %85 = vmatpush.msra.mxu0 0.0
    %86 = vmatpush.msra.mxu0 0.0
    %87 = vmatpush.msra.mxu0 0.0
    %88 = vmatpush.msra.mxu0 0.0
    %89 = vmatpush.msra.mxu0 0.0
    %90 = vmatpush.msra.mxu0 0.0
    %91 = vmatpush.msra.mxu0 0.0
    %92 = vmatpush.msra.mxu0 0.0
    %93 = vmatpush.msra.mxu0 %v54
    %94 = vmatpush.msra.mxu0 %v53
    %95 = vmatpush.msra.mxu0 %v52
    %96 = vmatpush.msra.mxu0 %v51
    %97 = vmatmul.f32.gmra.mxu0 %v61
    %v98 = vpop.f32.mrf.mxu0
    %v99 = vadd.f32 %v57, %v98
    %100 = vmatmul.f32.gmra.mxu0 %v64
    %v101 = vpop.f32.mrf.mxu0
    %v102 = vadd.f32 %v57, %v101
    %103 = vmatmul.f32.gmra.mxu0 %v67
    %v104 = vpop.f32.mrf.mxu0
    %v105 = vadd.f32 %v57, %v104
    %106 = vmatmul.f32.gmra.mxu0 %v70
    %v107 = vpop.f32.mrf.mxu0
    %v108 = vadd.f32 %v57, %v107
    %109 = vmatmul.f32.gmra.mxu0 %v73
    %v110 = vpop.f32.mrf.mxu0
    %v111 = vadd.f32 %v57, %v110
    %112 = vmatmul.f32.gmra.mxu0 %v76
    %v113 = vpop.f32.mrf.mxu0
    %v114 = vadd.f32 %v57, %v113
    %115 = vmatmul.f32.gmra.mxu0 %v79
    %v116 = vpop.f32.mrf.mxu0
    %v117 = vadd.f32 %v57, %v116
    %118 = vdwg.mxu0
    %119 = vst [vmem:[#allocation2] sm:$0xff] %v99
    %120 = vst [vmem:[#allocation2 + $0x8] sm:$0xff] %v102
    %121 = vst [vmem:[#allocation2 + $0x10] sm:$0xff] %v105
    %122 = vst [vmem:[#allocation2 + $0x18] sm:$0xff] %v108
    %123 = vst [vmem:[#allocation2 + $0x20] sm:$0xff] %v111
    %124 = vst [vmem:[#allocation2 + $0x28] sm:$0xff] %v114
    %125 = vst [vmem:[#allocation2 + $0x30] sm:$0xff] %v117
    %v126 = vld [vmem:[%s2] sm:$0xff]
    %v127 = vmul.f32 %v36, %v126
    %v128 = vmul.f32 %v37, %v126
    %v129 = vmul.f32 %v38, %v126
    %v130 = vmul.f32 %v39, %v126
    %v131 = vmul.f32 %v40, %v126
    %v132 = vmul.f32 %v41, %v126
    %v133 = vmul.f32 %v42, %v126
    %v134 = vmul.f32 %v43, %v126
    %v135 = vsel %vm59, %v127, 0.0
    %136 = vadd.xlane.f32.xlu0 %v135
    %v137 = vpop.xlane.xlu0 %136
    %v138 = vsel %vm59, %v128, 0.0
    %139 = vadd.xlane.f32.xlu0 %v138
    %v140 = vpop.xlane.xlu0 %139
    %v141 = vsel %vm59, %v129, 0.0
    %142 = vadd.xlane.f32.xlu0 %v141
    %v143 = vpop.xlane.xlu0 %142
    %v144 = vsel %vm59, %v130, 0.0
    %145 = vadd.xlane.f32.xlu0 %v144
    %v146 = vpop.xlane.xlu0 %145
    %v147 = vsel %vm59, %v131, 0.0
    %148 = vadd.xlane.f32.xlu0 %v147
    %v149 = vpop.xlane.xlu0 %148
    %v150 = vsel %vm59, %v132, 0.0
    %151 = vadd.xlane.f32.xlu0 %v150
    %v152 = vpop.xlane.xlu0 %151
    %v153 = vsel %vm59, %v133, 0.0
    %154 = vadd.xlane.f32.xlu0 %v153
    %v155 = vpop.xlane.xlu0 %154
    %v156 = vsel %vm59, %v134, 0.0
    %157 = vadd.xlane.f32.xlu0 %v156
    %v158 = vpop.xlane.xlu0 %157
    %v159 = vmax.f32 %v137, %v149
    %v160 = vmax.f32 %v140, %v152
    %v161 = vmax.f32 %v143, %v155
    %v162 = vmax.f32 %v146, %v158
    %v163 = vmax.f32 %v159, %v160
    %v164 = vmax.f32 %v161, %v162
    %v165 = vmax.f32 %v163, %v164
    %v166 = vsub.f32 %v137, %v165
    %v167 = vsub.f32 %v140, %v165
    %v168 = vsub.f32 %v143, %v165
    %v169 = vsub.f32 %v146, %v165
    %v170 = vsub.f32 %v149, %v165
    %v171 = vsub.f32 %v152, %v165
    %v172 = vsub.f32 %v155, %v165
    %v173 = vsub.f32 %v158, %v165
    %v174 = vmul.f32 %v166, 1.442695
    %v175 = vpow.pop %v174
    %v176 = vmul.f32 %v167, 1.442695
    %v177 = vpow.pop %v176
    %v178 = vmul.f32 %v168, 1.442695
    %v179 = vpow.pop %v178
    %v180 = vmul.f32 %v169, 1.442695
    %v181 = vpow.pop %v180
    %v182 = vmul.f32 %v170, 1.442695
    %v183 = vpow.pop %v182
    %v184 = vmul.f32 %v171, 1.442695
    %v185 = vpow.pop %v184
    %v186 = vmul.f32 %v172, 1.442695
    %v187 = vpow.pop %v186
    %v188 = vmul.f32 %v173, 1.442695
    %v189 = vpow.pop %v188
    %v190 = vadd.f32 %v175, %v177
    %v191 = vadd.f32 %v190, %v179
    %v192 = vadd.f32 %v191, %v181
    %v193 = vadd.f32 %v192, %v183
    %v194 = vadd.f32 %v193, %v185
    %v195 = vadd.f32 %v194, %v187
    %v196 = vadd.f32 %v195, %v189
    %v197 = vrcp.pop %v196
    %v198 = vmul.f32 %v175, %v197
    %v199 = vmul.f32 %v177, %v197
    %v200 = vmul.f32 %v179, %v197
    %v201 = vmul.f32 %v181, %v197
    %v202 = vmul.f32 %v183, %v197
    %v203 = vmul.f32 %v185, %v197
    %v204 = vmul.f32 %v187, %v197
    %v205 = vmul.f32 %v189, %v197
    %v206 = vmul.f32 %v198, %v36
    %v207 = vmul.f32 %v199, %v37
    %v208 = vmul.f32 %v200, %v38
    %v209 = vmul.f32 %v201, %v39
    %v210 = vmul.f32 %v202, %v40
    %v211 = vmul.f32 %v203, %v41
    %v212 = vmul.f32 %v204, %v42
    %v213 = vmul.f32 %v205, %v43
    %v214 = vsel %vm59, %v206, 0.0
    %v215 = vsel %vm59, %v207, 0.0
    %v216 = vadd.f32 %v214, %v215
    %v217 = vsel %vm59, %v208, 0.0
    %v218 = vadd.f32 %v216, %v217
    %v219 = vsel %vm59, %v209, 0.0
    %v220 = vadd.f32 %v218, %v219
    %v221 = vsel %vm59, %v210, 0.0
    %v222 = vadd.f32 %v220, %v221
    %v223 = vsel %vm59, %v211, 0.0
    %v224 = vadd.f32 %v222, %v223
    %v225 = vsel %vm59, %v212, 0.0
    %v226 = vadd.f32 %v224, %v225
    %v227 = vsel %vm59, %v213, 0.0
    %v228 = vadd.f32 %v226, %v227
    %v229 = vld [vmem:[#allocation2] sm:$0xff]
    %v230 = vld [vmem:[%s4] sm:$0xff]
    %v231 = vld [vmem:[%s4 + $0x8] sm:$0xff]
    %v232 = vld [vmem:[%s4 + $0x10] sm:$0xff]
    %v233 = vld [vmem:[%s4 + $0x18] sm:$0xff]
    %v235 = vsel %vm59, %v228, 0
    %237 = vmatpush.msra.mxu0 0.0
    %238 = vmatpush.msra.mxu0 0.0
    %239 = vmatpush.msra.mxu0 0.0
    %240 = vmatpush.msra.mxu0 0.0
    %241 = vmatpush.msra.mxu0 0.0
    %242 = vmatpush.msra.mxu0 0.0
    %243 = vmatpush.msra.mxu0 0.0
    %244 = vmatpush.msra.mxu0 0.0
    %245 = vmatpush.msra.mxu0 0.0
    %246 = vmatpush.msra.mxu0 0.0
    %247 = vmatpush.msra.mxu0 0.0
    %248 = vmatpush.msra.mxu0 0.0
    %249 = vmatpush.msra.mxu0 %v233
    %250 = vmatpush.msra.mxu0 %v232
    %251 = vmatpush.msra.mxu0 %v231
    %252 = vmatpush.msra.mxu0 %v230
    %253 = vmatmul.f32.gmra.mxu0 %v235
    %v254 = vpop.f32.mrf.mxu0
    %v255 = vadd.f32 0.0, %v254
    %256 = vdwg.mxu0
    %v257 = vadd.f32 %v229, %v255
    %v258 = vld [vmem:[%s5] sm:$0xff]
    %v259 = vld [vmem:[%s5 + $0x8] sm:$0xff]
    %v260 = vld [vmem:[%s5 + $0x10] sm:$0xff]
    %v261 = vld [vmem:[%s5 + $0x18] sm:$0xff]
    %v263 = vsel %vm59, %v126, 0
    %265 = vmatpush.msra.mxu0 0.0
    %266 = vmatpush.msra.mxu0 0.0
    %267 = vmatpush.msra.mxu0 0.0
    %268 = vmatpush.msra.mxu0 0.0
    %269 = vmatpush.msra.mxu0 0.0
    %270 = vmatpush.msra.mxu0 0.0
    %271 = vmatpush.msra.mxu0 0.0
    %272 = vmatpush.msra.mxu0 0.0
    %273 = vmatpush.msra.mxu0 0.0
    %274 = vmatpush.msra.mxu0 0.0
    %275 = vmatpush.msra.mxu0 0.0
    %276 = vmatpush.msra.mxu0 0.0
    %277 = vmatpush.msra.mxu0 %v261
    %278 = vmatpush.msra.mxu0 %v260
    %279 = vmatpush.msra.mxu0 %v259
    %280 = vmatpush.msra.mxu0 %v258
    %281 = vmatmul.f32.gmra.mxu0 %v263
    %v282 = vpop.f32.mrf.mxu0
    %v283 = vadd.f32 0.0, %v282
    %284 = vdwg.mxu0
    %v285 = vadd.f32 %v257, %v283
    %v286 = vxor.u32 %v285, 2147483648
    %v287 = vmul.f32 %v286, 1.442695
    %v288 = vpow.pop %v287
    %v289 = vadd.f32 %v288, 1.0
    %v290 = vrcp.pop %v289
    %v291 = vmul.f32 %v289, %v290
    %v292 = vsub.f32 1.0, %v291
    %v293 = vmul.f32 %v290, %v292
    %v294 = vadd.f32 %v290, %v293
    %vm295 = vweird.f32 %v289
    %vm296 = vweird.f32 %v290
    %vm297 = vmor %vm295, %vm296
    %v298 = vsel %vm297, %v290, %v294
    %v299 = vand.u32 2147483647, %v289
    %vm300 = vcmp.eq.f32.partialorder %v299, 8.507059e+37
    %v301 = vand.u32 %v289, 2147483648
    %v302 = vor.u32 1.1754944e-38, %v301
    %v303 = vsel %vm300, %v302, %v298
    %v304 = vmul.f32 1.0, %v303
    %306 = vrot.lane.b32.xlu0 %v285, 32
    %v307 = vpop.permute.xlu0 %306
    %v309 = vmul.f32 %v304, %v307
    %311 = vrot.lane.b32.xlu0 %v309, 64
    %v312 = vpop.permute.xlu0 %311
    %v314 = vadd.f32 %v285, %v312
    %v315 = vtanh.pop %v314
    %v316 = vsub.f32 1.0, %v304
    %318 = vrot.lane.b32.xlu0 %v315, 96
    %v319 = vpop.permute.xlu0 %318
    %v321 = vmul.f32 %v316, %v319
    %322 = vrot.lane.b32.xlu0 %v126, 32
    %v323 = vpop.permute.xlu0 %322
    %v325 = vmul.f32 %v304, %v323
    %v326 = vadd.f32 %v321, %v325
    %328 = vrot.lane.b32.xlu0 %v326, 96
    %v329 = vpop.permute.xlu0 %328
    %331 = vst.msk [vmem:[#allocation3] sm:$0xff] %vm59, %v329
    %v332 = vmul.f32 %v36, %v329
    %v333 = vmul.f32 %v37, %v329
    %v334 = vmul.f32 %v38, %v329
    %v335 = vmul.f32 %v39, %v329
    %v336 = vmul.f32 %v40, %v329
    %v337 = vmul.f32 %v41, %v329
    %v338 = vmul.f32 %v42, %v329
    %v339 = vmul.f32 %v43, %v329
    %v340 = vsel %vm59, %v332, 0.0
    %341 = vadd.xlane.f32.xlu0 %v340
    %v342 = vpop.xlane.xlu0 %341
    %v343 = vsel %vm59, %v333, 0.0
    %344 = vadd.xlane.f32.xlu0 %v343
    %v345 = vpop.xlane.xlu0 %344
    %v346 = vsel %vm59, %v334, 0.0
    %347 = vadd.xlane.f32.xlu0 %v346
    %v348 = vpop.xlane.xlu0 %347
    %v349 = vsel %vm59, %v335, 0.0
    %350 = vadd.xlane.f32.xlu0 %v349
    %v351 = vpop.xlane.xlu0 %350
    %v352 = vsel %vm59, %v336, 0.0
    %353 = vadd.xlane.f32.xlu0 %v352
    %v354 = vpop.xlane.xlu0 %353
    %v355 = vsel %vm59, %v337, 0.0
    %356 = vadd.xlane.f32.xlu0 %v355
    %v357 = vpop.xlane.xlu0 %356
    %v358 = vsel %vm59, %v338, 0.0
    %359 = vadd.xlane.f32.xlu0 %v358
    %v360 = vpop.xlane.xlu0 %359
    %v361 = vsel %vm59, %v339, 0.0
    %362 = vadd.xlane.f32.xlu0 %v361
    %v363 = vpop.xlane.xlu0 %362
    %v364 = vmax.f32 %v342, %v354
    %v365 = vmax.f32 %v345, %v357
    %v366 = vmax.f32 %v348, %v360
    %v367 = vmax.f32 %v351, %v363
    %v368 = vmax.f32 %v364, %v365
    %v369 = vmax.f32 %v366, %v367
    %v370 = vmax.f32 %v368, %v369
    %v371 = vsub.f32 %v342, %v370
    %v372 = vsub.f32 %v345, %v370
    %v373 = vsub.f32 %v348, %v370
    %v374 = vsub.f32 %v351, %v370
    %v375 = vsub.f32 %v354, %v370
    %v376 = vsub.f32 %v357, %v370
    %v377 = vsub.f32 %v360, %v370
    %v378 = vsub.f32 %v363, %v370
    %v379 = vmul.f32 %v371, 1.442695
    %v380 = vpow.pop %v379
    %v381 = vmul.f32 %v372, 1.442695
    %v382 = vpow.pop %v381
    %v383 = vmul.f32 %v373, 1.442695
    %v384 = vpow.pop %v383
    %v385 = vmul.f32 %v374, 1.442695
    %v386 = vpow.pop %v385
    %v387 = vmul.f32 %v375, 1.442695
    %v388 = vpow.pop %v387
    %v389 = vmul.f32 %v376, 1.442695
    %v390 = vpow.pop %v389
    %v391 = vmul.f32 %v377, 1.442695
    %v392 = vpow.pop %v391
    %v393 = vmul.f32 %v378, 1.442695
    %v394 = vpow.pop %v393
    %v395 = vadd.f32 %v380, %v382
    %v396 = vadd.f32 %v395, %v384
    %v397 = vadd.f32 %v396, %v386
    %v398 = vadd.f32 %v397, %v388
    %v399 = vadd.f32 %v398, %v390
    %v400 = vadd.f32 %v399, %v392
    %v401 = vadd.f32 %v400, %v394
    %v402 = vrcp.pop %v401
    %v403 = vmul.f32 %v380, %v402
    %v404 = vmul.f32 %v382, %v402
    %v405 = vmul.f32 %v384, %v402
    %v406 = vmul.f32 %v386, %v402
    %v407 = vmul.f32 %v388, %v402
    %v408 = vmul.f32 %v390, %v402
    %v409 = vmul.f32 %v392, %v402
    %v410 = vmul.f32 %v394, %v402
    %v411 = vmul.f32 %v403, %v36
    %v412 = vmul.f32 %v404, %v37
    %v413 = vmul.f32 %v405, %v38
    %v414 = vmul.f32 %v406, %v39
    %v415 = vmul.f32 %v407, %v40
    %v416 = vmul.f32 %v408, %v41
    %v417 = vmul.f32 %v409, %v42
    %v418 = vmul.f32 %v410, %v43
    %v419 = vsel %vm59, %v411, 0.0
    %v420 = vsel %vm59, %v412, 0.0
    %v421 = vadd.f32 %v419, %v420
    %v422 = vsel %vm59, %v413, 0.0
    %v423 = vadd.f32 %v421, %v422
    %v424 = vsel %vm59, %v414, 0.0
    %v425 = vadd.f32 %v423, %v424
    %v426 = vsel %vm59, %v415, 0.0
    %v427 = vadd.f32 %v425, %v426
    %v428 = vsel %vm59, %v416, 0.0
    %v429 = vadd.f32 %v427, %v428
    %v430 = vsel %vm59, %v417, 0.0
    %v431 = vadd.f32 %v429, %v430
    %v432 = vsel %vm59, %v418, 0.0
    %v433 = vadd.f32 %v431, %v432
    %s434 = scalar_lea.vmem [#allocation2], 8
    %v435 = vld [vmem:[%s434] sm:$0xff]
    %v436 = vld [vmem:[%s4] sm:$0xff]
    %v437 = vld [vmem:[%s4 + $0x8] sm:$0xff]
    %v438 = vld [vmem:[%s4 + $0x10] sm:$0xff]
    %v439 = vld [vmem:[%s4 + $0x18] sm:$0xff]
    %v441 = vsel %vm59, %v433, 0
    %443 = vmatpush.msra.mxu0 0.0
    %444 = vmatpush.msra.mxu0 0.0
    %445 = vmatpush.msra.mxu0 0.0
    %446 = vmatpush.msra.mxu0 0.0
    %447 = vmatpush.msra.mxu0 0.0
    %448 = vmatpush.msra.mxu0 0.0
    %449 = vmatpush.msra.mxu0 0.0
    %450 = vmatpush.msra.mxu0 0.0
    %451 = vmatpush.msra.mxu0 0.0
    %452 = vmatpush.msra.mxu0 0.0
    %453 = vmatpush.msra.mxu0 0.0
    %454 = vmatpush.msra.mxu0 0.0
    %455 = vmatpush.msra.mxu0 %v439
    %456 = vmatpush.msra.mxu0 %v438
    %457 = vmatpush.msra.mxu0 %v437
    %458 = vmatpush.msra.mxu0 %v436
    %459 = vmatmul.f32.gmra.mxu0 %v441
    %v460 = vpop.f32.mrf.mxu0
    %v461 = vadd.f32 0.0, %v460
    %462 = vdwg.mxu0
    %v463 = vadd.f32 %v435, %v461
    %v464 = vld [vmem:[%s5] sm:$0xff]
    %v465 = vld [vmem:[%s5 + $0x8] sm:$0xff]
    %v466 = vld [vmem:[%s5 + $0x10] sm:$0xff]
    %v467 = vld [vmem:[%s5 + $0x18] sm:$0xff]
    %v468 = vsel %vm59, %v329, 0
    %470 = vmatpush.msra.mxu0 0.0
    %471 = vmatpush.msra.mxu0 0.0
    %472 = vmatpush.msra.mxu0 0.0
    %473 = vmatpush.msra.mxu0 0.0
    %474 = vmatpush.msra.mxu0 0.0
    %475 = vmatpush.msra.mxu0 0.0
    %476 = vmatpush.msra.mxu0 0.0
    %477 = vmatpush.msra.mxu0 0.0
    %478 = vmatpush.msra.mxu0 0.0
    %479 = vmatpush.msra.mxu0 0.0
    %480 = vmatpush.msra.mxu0 0.0
    %481 = vmatpush.msra.mxu0 0.0
    %482 = vmatpush.msra.mxu0 %v467
    %483 = vmatpush.msra.mxu0 %v466
    %484 = vmatpush.msra.mxu0 %v465
    %485 = vmatpush.msra.mxu0 %v464
    %486 = vmatmul.f32.gmra.mxu0 %v468
    %v487 = vpop.f32.mrf.mxu0
    %v488 = vadd.f32 0.0, %v487
    %489 = vdwg.mxu0
    %v490 = vadd.f32 %v463, %v488
    %v491 = vxor.u32 %v490, 2147483648
    %v492 = vmul.f32 %v491, 1.442695
    %v493 = vpow.pop %v492
    %v494 = vadd.f32 %v493, 1.0
    %v495 = vrcp.pop %v494
    %v496 = vmul.f32 %v494, %v495
    %v497 = vsub.f32 1.0, %v496
    %v498 = vmul.f32 %v495, %v497
    %v499 = vadd.f32 %v495, %v498
    %vm500 = vweird.f32 %v494
    %vm501 = vweird.f32 %v495
    %vm502 = vmor %vm500, %vm501
    %v503 = vsel %vm502, %v495, %v499
    %v504 = vand.u32 2147483647, %v494
    %vm505 = vcmp.eq.f32.partialorder %v504, 8.507059e+37
    %v506 = vand.u32 %v494, 2147483648
    %v507 = vor.u32 1.1754944e-38, %v506
    %v508 = vsel %vm505, %v507, %v503
    %v509 = vmul.f32 1.0, %v508
    %511 = vrot.lane.b32.xlu0 %v490, 32
    %v512 = vpop.permute.xlu0 %511
    %v514 = vmul.f32 %v509, %v512
    %516 = vrot.lane.b32.xlu0 %v514, 64
    %v517 = vpop.permute.xlu0 %516
    %v519 = vadd.f32 %v490, %v517
    %v520 = vtanh.pop %v519
    %v521 = vsub.f32 1.0, %v509
    %523 = vrot.lane.b32.xlu0 %v520, 96
    %v524 = vpop.permute.xlu0 %523
    %v526 = vmul.f32 %v521, %v524
    %v527 = vmul.f32 %v509, %v326
    %v528 = vadd.f32 %v526, %v527
    %530 = vrot.lane.b32.xlu0 %v528, 96
    %v531 = vpop.permute.xlu0 %530
    %s533 = scalar_lea.vmem [#allocation3], 8
    %534 = vst.msk [vmem:[%s533] sm:$0xff] %vm59, %v531
    %v535 = vmul.f32 %v36, %v531
    %v536 = vmul.f32 %v37, %v531
    %v537 = vmul.f32 %v38, %v531
    %v538 = vmul.f32 %v39, %v531
    %v539 = vmul.f32 %v40, %v531
    %v540 = vmul.f32 %v41, %v531
    %v541 = vmul.f32 %v42, %v531
    %v542 = vmul.f32 %v43, %v531
    %v543 = vsel %vm59, %v535, 0.0
    %544 = vadd.xlane.f32.xlu0 %v543
    %v545 = vpop.xlane.xlu0 %544
    %v546 = vsel %vm59, %v536, 0.0
    %547 = vadd.xlane.f32.xlu0 %v546
    %v548 = vpop.xlane.xlu0 %547
    %v549 = vsel %vm59, %v537, 0.0
    %550 = vadd.xlane.f32.xlu0 %v549
    %v551 = vpop.xlane.xlu0 %550
    %v552 = vsel %vm59, %v538, 0.0
    %553 = vadd.xlane.f32.xlu0 %v552
    %v554 = vpop.xlane.xlu0 %553
    %v555 = vsel %vm59, %v539, 0.0
    %556 = vadd.xlane.f32.xlu0 %v555
    %v557 = vpop.xlane.xlu0 %556
    %v558 = vsel %vm59, %v540, 0.0
    %559 = vadd.xlane.f32.xlu0 %v558
    %v560 = vpop.xlane.xlu0 %559
    %v561 = vsel %vm59, %v541, 0.0
    %562 = vadd.xlane.f32.xlu0 %v561
    %v563 = vpop.xlane.xlu0 %562
    %v564 = vsel %vm59, %v542, 0.0
    %565 = vadd.xlane.f32.xlu0 %v564
    %v566 = vpop.xlane.xlu0 %565
    %v567 = vmax.f32 %v545, %v557
    %v568 = vmax.f32 %v548, %v560
    %v569 = vmax.f32 %v551, %v563
    %v570 = vmax.f32 %v554, %v566
    %v571 = vmax.f32 %v567, %v568
    %v572 = vmax.f32 %v569, %v570
    %v573 = vmax.f32 %v571, %v572
    %v574 = vsub.f32 %v545, %v573
    %v575 = vsub.f32 %v548, %v573
    %v576 = vsub.f32 %v551, %v573
    %v577 = vsub.f32 %v554, %v573
    %v578 = vsub.f32 %v557, %v573
    %v579 = vsub.f32 %v560, %v573
    %v580 = vsub.f32 %v563, %v573
    %v581 = vsub.f32 %v566, %v573
    %v582 = vmul.f32 %v574, 1.442695
    %v583 = vpow.pop %v582
    %v584 = vmul.f32 %v575, 1.442695
    %v585 = vpow.pop %v584
    %v586 = vmul.f32 %v576, 1.442695
    %v587 = vpow.pop %v586
    %v588 = vmul.f32 %v577, 1.442695
    %v589 = vpow.pop %v588
    %v590 = vmul.f32 %v578, 1.442695
    %v591 = vpow.pop %v590
    %v592 = vmul.f32 %v579, 1.442695
    %v593 = vpow.pop %v592
    %v594 = vmul.f32 %v580, 1.442695
    %v595 = vpow.pop %v594
    %v596 = vmul.f32 %v581, 1.442695
    %v597 = vpow.pop %v596
    %v598 = vadd.f32 %v583, %v585
    %v599 = vadd.f32 %v598, %v587
    %v600 = vadd.f32 %v599, %v589
    %v601 = vadd.f32 %v600, %v591
    %v602 = vadd.f32 %v601, %v593
    %v603 = vadd.f32 %v602, %v595
    %v604 = vadd.f32 %v603, %v597
    %v605 = vrcp.pop %v604
    %v606 = vmul.f32 %v583, %v605
    %v607 = vmul.f32 %v585, %v605
    %v608 = vmul.f32 %v587, %v605
    %v609 = vmul.f32 %v589, %v605
    %v610 = vmul.f32 %v591, %v605
    %v611 = vmul.f32 %v593, %v605
    %v612 = vmul.f32 %v595, %v605
    %v613 = vmul.f32 %v597, %v605
    %v614 = vmul.f32 %v606, %v36
    %v615 = vmul.f32 %v607, %v37
    %v616 = vmul.f32 %v608, %v38
    %v617 = vmul.f32 %v609, %v39
    %v618 = vmul.f32 %v610, %v40
    %v619 = vmul.f32 %v611, %v41
    %v620 = vmul.f32 %v612, %v42
    %v621 = vmul.f32 %v613, %v43
    %v622 = vsel %vm59, %v614, 0.0
    %v623 = vsel %vm59, %v615, 0.0
    %v624 = vadd.f32 %v622, %v623
    %v625 = vsel %vm59, %v616, 0.0
    %v626 = vadd.f32 %v624, %v625
    %v627 = vsel %vm59, %v617, 0.0
    %v628 = vadd.f32 %v626, %v627
    %v629 = vsel %vm59, %v618, 0.0
    %v630 = vadd.f32 %v628, %v629
    %v631 = vsel %vm59, %v619, 0.0
    %v632 = vadd.f32 %v630, %v631
    %v633 = vsel %vm59, %v620, 0.0
    %v634 = vadd.f32 %v632, %v633
    %v635 = vsel %vm59, %v621, 0.0
    %v636 = vadd.f32 %v634, %v635
    %s637 = scalar_lea.vmem [#allocation2], 16
    %v638 = vld [vmem:[%s637] sm:$0xff]
    %v639 = vld [vmem:[%s4] sm:$0xff]
    %v640 = vld [vmem:[%s4 + $0x8] sm:$0xff]
    %v641 = vld [vmem:[%s4 + $0x10] sm:$0xff]
    %v642 = vld [vmem:[%s4 + $0x18] sm:$0xff]
    %v644 = vsel %vm59, %v636, 0
    %646 = vmatpush.msra.mxu0 0.0
    %647 = vmatpush.msra.mxu0 0.0
    %648 = vmatpush.msra.mxu0 0.0
    %649 = vmatpush.msra.mxu0 0.0
    %650 = vmatpush.msra.mxu0 0.0
    %651 = vmatpush.msra.mxu0 0.0
    %652 = vmatpush.msra.mxu0 0.0
    %653 = vmatpush.msra.mxu0 0.0
    %654 = vmatpush.msra.mxu0 0.0
    %655 = vmatpush.msra.mxu0 0.0
    %656 = vmatpush.msra.mxu0 0.0
    %657 = vmatpush.msra.mxu0 0.0
    %658 = vmatpush.msra.mxu0 %v642
    %659 = vmatpush.msra.mxu0 %v641
    %660 = vmatpush.msra.mxu0 %v640
    %661 = vmatpush.msra.mxu0 %v639
    %662 = vmatmul.f32.gmra.mxu0 %v644
    %v663 = vpop.f32.mrf.mxu0
    %v664 = vadd.f32 0.0, %v663
    %665 = vdwg.mxu0
    %v666 = vadd.f32 %v638, %v664
    %v667 = vld [vmem:[%s5] sm:$0xff]
    %v668 = vld [vmem:[%s5 + $0x8] sm:$0xff]
    %v669 = vld [vmem:[%s5 + $0x10] sm:$0xff]
    %v670 = vld [vmem:[%s5 + $0x18] sm:$0xff]
    %v671 = vsel %vm59, %v531, 0
    %673 = vmatpush.msra.mxu0 0.0
    %674 = vmatpush.msra.mxu0 0.0
    %675 = vmatpush.msra.mxu0 0.0
    %676 = vmatpush.msra.mxu0 0.0
    %677 = vmatpush.msra.mxu0 0.0
    %678 = vmatpush.msra.mxu0 0.0
    %679 = vmatpush.msra.mxu0 0.0
    %680 = vmatpush.msra.mxu0 0.0
    %681 = vmatpush.msra.mxu0 0.0
    %682 = vmatpush.msra.mxu0 0.0
    %683 = vmatpush.msra.mxu0 0.0
    %684 = vmatpush.msra.mxu0 0.0
    %685 = vmatpush.msra.mxu0 %v670
    %686 = vmatpush.msra.mxu0 %v669
    %687 = vmatpush.msra.mxu0 %v668
    %688 = vmatpush.msra.mxu0 %v667
    %689 = vmatmul.f32.gmra.mxu0 %v671
    %v690 = vpop.f32.mrf.mxu0
    %v691 = vadd.f32 0.0, %v690
    %692 = vdwg.mxu0
    %v693 = vadd.f32 %v666, %v691
    %v694 = vxor.u32 %v693, 2147483648
    %v695 = vmul.f32 %v694, 1.442695
    %v696 = vpow.pop %v695
    %v697 = vadd.f32 %v696, 1.0
    %v698 = vrcp.pop %v697
    %v699 = vmul.f32 %v697, %v698
    %v700 = vsub.f32 1.0, %v699
    %v701 = vmul.f32 %v698, %v700
    %v702 = vadd.f32 %v698, %v701
    %vm703 = vweird.f32 %v697
    %vm704 = vweird.f32 %v698
    %vm705 = vmor %vm703, %vm704
    %v706 = vsel %vm705, %v698, %v702
    %v707 = vand.u32 2147483647, %v697
    %vm708 = vcmp.eq.f32.partialorder %v707, 8.507059e+37
    %v709 = vand.u32 %v697, 2147483648
    %v710 = vor.u32 1.1754944e-38, %v709
    %v711 = vsel %vm708, %v710, %v706
    %v712 = vmul.f32 1.0, %v711
    %714 = vrot.lane.b32.xlu0 %v693, 32
    %v715 = vpop.permute.xlu0 %714
    %v717 = vmul.f32 %v712, %v715
    %719 = vrot.lane.b32.xlu0 %v717, 64
    %v720 = vpop.permute.xlu0 %719
    %v722 = vadd.f32 %v693, %v720
    %v723 = vtanh.pop %v722
    %v724 = vsub.f32 1.0, %v712
    %726 = vrot.lane.b32.xlu0 %v723, 96
    %v727 = vpop.permute.xlu0 %726
    %v729 = vmul.f32 %v724, %v727
    %v730 = vmul.f32 %v712, %v528
    %v731 = vadd.f32 %v729, %v730
    %733 = vrot.lane.b32.xlu0 %v731, 96
    %v734 = vpop.permute.xlu0 %733
    %s736 = scalar_lea.vmem [#allocation3], 16
    %737 = vst.msk [vmem:[%s736] sm:$0xff] %vm59, %v734
    %v738 = vmul.f32 %v36, %v734
    %v739 = vmul.f32 %v37, %v734
    %v740 = vmul.f32 %v38, %v734
    %v741 = vmul.f32 %v39, %v734
    %v742 = vmul.f32 %v40, %v734
    %v743 = vmul.f32 %v41, %v734
    %v744 = vmul.f32 %v42, %v734
    %v745 = vmul.f32 %v43, %v734
    %v746 = vsel %vm59, %v738, 0.0
    %747 = vadd.xlane.f32.xlu0 %v746
    %v748 = vpop.xlane.xlu0 %747
    %v749 = vsel %vm59, %v739, 0.0
    %750 = vadd.xlane.f32.xlu0 %v749
    %v751 = vpop.xlane.xlu0 %750
    %v752 = vsel %vm59, %v740, 0.0
    %753 = vadd.xlane.f32.xlu0 %v752
    %v754 = vpop.xlane.xlu0 %753
    %v755 = vsel %vm59, %v741, 0.0
    %756 = vadd.xlane.f32.xlu0 %v755
    %v757 = vpop.xlane.xlu0 %756
    %v758 = vsel %vm59, %v742, 0.0
    %759 = vadd.xlane.f32.xlu0 %v758
    %v760 = vpop.xlane.xlu0 %759
    %v761 = vsel %vm59, %v743, 0.0
    %762 = vadd.xlane.f32.xlu0 %v761
    %v763 = vpop.xlane.xlu0 %762
    %v764 = vsel %vm59, %v744, 0.0
    %765 = vadd.xlane.f32.xlu0 %v764
    %v766 = vpop.xlane.xlu0 %765
    %v767 = vsel %vm59, %v745, 0.0
    %768 = vadd.xlane.f32.xlu0 %v767
    %v769 = vpop.xlane.xlu0 %768
    %v770 = vmax.f32 %v748, %v760
    %v771 = vmax.f32 %v751, %v763
    %v772 = vmax.f32 %v754, %v766
    %v773 = vmax.f32 %v757, %v769
    %v774 = vmax.f32 %v770, %v771
    %v775 = vmax.f32 %v772, %v773
    %v776 = vmax.f32 %v774, %v775
    %v777 = vsub.f32 %v748, %v776
    %v778 = vsub.f32 %v751, %v776
    %v779 = vsub.f32 %v754, %v776
    %v780 = vsub.f32 %v757, %v776
    %v781 = vsub.f32 %v760, %v776
    %v782 = vsub.f32 %v763, %v776
    %v783 = vsub.f32 %v766, %v776
    %v784 = vsub.f32 %v769, %v776
    %v785 = vmul.f32 %v777, 1.442695
    %v786 = vpow.pop %v785
    %v787 = vmul.f32 %v778, 1.442695
    %v788 = vpow.pop %v787
    %v789 = vmul.f32 %v779, 1.442695
    %v790 = vpow.pop %v789
    %v791 = vmul.f32 %v780, 1.442695
    %v792 = vpow.pop %v791
    %v793 = vmul.f32 %v781, 1.442695
    %v794 = vpow.pop %v793
    %v795 = vmul.f32 %v782, 1.442695
    %v796 = vpow.pop %v795
    %v797 = vmul.f32 %v783, 1.442695
    %v798 = vpow.pop %v797
    %v799 = vmul.f32 %v784, 1.442695
    %v800 = vpow.pop %v799
    %v801 = vadd.f32 %v786, %v788
    %v802 = vadd.f32 %v801, %v790
    %v803 = vadd.f32 %v802, %v792
    %v804 = vadd.f32 %v803, %v794
    %v805 = vadd.f32 %v804, %v796
    %v806 = vadd.f32 %v805, %v798
    %v807 = vadd.f32 %v806, %v800
    %v808 = vrcp.pop %v807
    %v809 = vmul.f32 %v786, %v808
    %v810 = vmul.f32 %v788, %v808
    %v811 = vmul.f32 %v790, %v808
    %v812 = vmul.f32 %v792, %v808
    %v813 = vmul.f32 %v794, %v808
    %v814 = vmul.f32 %v796, %v808
    %v815 = vmul.f32 %v798, %v808
    %v816 = vmul.f32 %v800, %v808
    %v817 = vmul.f32 %v809, %v36
    %v818 = vmul.f32 %v810, %v37
    %v819 = vmul.f32 %v811, %v38
    %v820 = vmul.f32 %v812, %v39
    %v821 = vmul.f32 %v813, %v40
    %v822 = vmul.f32 %v814, %v41
    %v823 = vmul.f32 %v815, %v42
    %v824 = vmul.f32 %v816, %v43
    %v825 = vsel %vm59, %v817, 0.0
    %v826 = vsel %vm59, %v818, 0.0
    %v827 = vadd.f32 %v825, %v826
    %v828 = vsel %vm59, %v819, 0.0
    %v829 = vadd.f32 %v827, %v828
    %v830 = vsel %vm59, %v820, 0.0
    %v831 = vadd.f32 %v829, %v830
    %v832 = vsel %vm59, %v821, 0.0
    %v833 = vadd.f32 %v831, %v832
    %v834 = vsel %vm59, %v822, 0.0
    %v835 = vadd.f32 %v833, %v834
    %v836 = vsel %vm59, %v823, 0.0
    %v837 = vadd.f32 %v835, %v836
    %v838 = vsel %vm59, %v824, 0.0
    %v839 = vadd.f32 %v837, %v838
    %s840 = scalar_lea.vmem [#allocation2], 24
    %v841 = vld [vmem:[%s840] sm:$0xff]
    %v842 = vld [vmem:[%s4] sm:$0xff]
    %v843 = vld [vmem:[%s4 + $0x8] sm:$0xff]
    %v844 = vld [vmem:[%s4 + $0x10] sm:$0xff]
    %v845 = vld [vmem:[%s4 + $0x18] sm:$0xff]
    %v847 = vsel %vm59, %v839, 0
    %849 = vmatpush.msra.mxu0 0.0
    %850 = vmatpush.msra.mxu0 0.0
    %851 = vmatpush.msra.mxu0 0.0
    %852 = vmatpush.msra.mxu0 0.0
    %853 = vmatpush.msra.mxu0 0.0
    %854 = vmatpush.msra.mxu0 0.0
    %855 = vmatpush.msra.mxu0 0.0
    %856 = vmatpush.msra.mxu0 0.0
    %857 = vmatpush.msra.mxu0 0.0
    %858 = vmatpush.msra.mxu0 0.0
    %859 = vmatpush.msra.mxu0 0.0
    %860 = vmatpush.msra.mxu0 0.0
    %861 = vmatpush.msra.mxu0 %v845
    %862 = vmatpush.msra.mxu0 %v844
    %863 = vmatpush.msra.mxu0 %v843
    %864 = vmatpush.msra.mxu0 %v842
    %865 = vmatmul.f32.gmra.mxu0 %v847
    %v866 = vpop.f32.mrf.mxu0
    %v867 = vadd.f32 0.0, %v866
    %868 = vdwg.mxu0
    %v869 = vadd.f32 %v841, %v867
    %v870 = vld [vmem:[%s5] sm:$0xff]
    %v871 = vld [vmem:[%s5 + $0x8] sm:$0xff]
    %v872 = vld [vmem:[%s5 + $0x10] sm:$0xff]
    %v873 = vld [vmem:[%s5 + $0x18] sm:$0xff]
    %v874 = vsel %vm59, %v734, 0
    %876 = vmatpush.msra.mxu0 0.0
    %877 = vmatpush.msra.mxu0 0.0
    %878 = vmatpush.msra.mxu0 0.0
    %879 = vmatpush.msra.mxu0 0.0
    %880 = vmatpush.msra.mxu0 0.0
    %881 = vmatpush.msra.mxu0 0.0
    %882 = vmatpush.msra.mxu0 0.0
    %883 = vmatpush.msra.mxu0 0.0
    %884 = vmatpush.msra.mxu0 0.0
    %885 = vmatpush.msra.mxu0 0.0
    %886 = vmatpush.msra.mxu0 0.0
    %887 = vmatpush.msra.mxu0 0.0
    %888 = vmatpush.msra.mxu0 %v873
    %889 = vmatpush.msra.mxu0 %v872
    %890 = vmatpush.msra.mxu0 %v871
    %891 = vmatpush.msra.mxu0 %v870
    %892 = vmatmul.f32.gmra.mxu0 %v874
    %v893 = vpop.f32.mrf.mxu0
    %v894 = vadd.f32 0.0, %v893
    %895 = vdwg.mxu0
    %v896 = vadd.f32 %v869, %v894
    %v897 = vxor.u32 %v896, 2147483648
    %v898 = vmul.f32 %v897, 1.442695
    %v899 = vpow.pop %v898
    %v900 = vadd.f32 %v899, 1.0
    %v901 = vrcp.pop %v900
    %v902 = vmul.f32 %v900, %v901
    %v903 = vsub.f32 1.0, %v902
    %v904 = vmul.f32 %v901, %v903
    %v905 = vadd.f32 %v901, %v904
    %vm906 = vweird.f32 %v900
    %vm907 = vweird.f32 %v901
    %vm908 = vmor %vm906, %vm907
    %v909 = vsel %vm908, %v901, %v905
    %v910 = vand.u32 2147483647, %v900
    %vm911 = vcmp.eq.f32.partialorder %v910, 8.507059e+37
    %v912 = vand.u32 %v900, 2147483648
    %v913 = vor.u32 1.1754944e-38, %v912
    %v914 = vsel %vm911, %v913, %v909
    %v915 = vmul.f32 1.0, %v914
    %917 = vrot.lane.b32.xlu0 %v896, 32
    %v918 = vpop.permute.xlu0 %917
    %v920 = vmul.f32 %v915, %v918
    %922 = vrot.lane.b32.xlu0 %v920, 64
    %v923 = vpop.permute.xlu0 %922
    %v925 = vadd.f32 %v896, %v923
    %v926 = vtanh.pop %v925
    %v927 = vsub.f32 1.0, %v915
    %929 = vrot.lane.b32.xlu0 %v926, 96
    %v930 = vpop.permute.xlu0 %929
    %v932 = vmul.f32 %v927, %v930
    %v933 = vmul.f32 %v915, %v731
    %v934 = vadd.f32 %v932, %v933
    %936 = vrot.lane.b32.xlu0 %v934, 96
    %v937 = vpop.permute.xlu0 %936
    %s939 = scalar_lea.vmem [#allocation3], 24
    %940 = vst.msk [vmem:[%s939] sm:$0xff] %vm59, %v937
    %v941 = vmul.f32 %v36, %v937
    %v942 = vmul.f32 %v37, %v937
    %v943 = vmul.f32 %v38, %v937
    %v944 = vmul.f32 %v39, %v937
    %v945 = vmul.f32 %v40, %v937
    %v946 = vmul.f32 %v41, %v937
    %v947 = vmul.f32 %v42, %v937
    %v948 = vmul.f32 %v43, %v937
    %v949 = vsel %vm59, %v941, 0.0
    %950 = vadd.xlane.f32.xlu0 %v949
    %v951 = vpop.xlane.xlu0 %950
    %v952 = vsel %vm59, %v942, 0.0
    %953 = vadd.xlane.f32.xlu0 %v952
    %v954 = vpop.xlane.xlu0 %953
    %v955 = vsel %vm59, %v943, 0.0
    %956 = vadd.xlane.f32.xlu0 %v955
    %v957 = vpop.xlane.xlu0 %956
    %v958 = vsel %vm59, %v944, 0.0
    %959 = vadd.xlane.f32.xlu0 %v958
    %v960 = vpop.xlane.xlu0 %959
    %v961 = vsel %vm59, %v945, 0.0
    %962 = vadd.xlane.f32.xlu0 %v961
    %v963 = vpop.xlane.xlu0 %962
    %v964 = vsel %vm59, %v946, 0.0
    %965 = vadd.xlane.f32.xlu0 %v964
    %v966 = vpop.xlane.xlu0 %965
    %v967 = vsel %vm59, %v947, 0.0
    %968 = vadd.xlane.f32.xlu0 %v967
    %v969 = vpop.xlane.xlu0 %968
    %v970 = vsel %vm59, %v948, 0.0
    %971 = vadd.xlane.f32.xlu0 %v970
    %v972 = vpop.xlane.xlu0 %971
    %v973 = vmax.f32 %v951, %v963
    %v974 = vmax.f32 %v954, %v966
    %v975 = vmax.f32 %v957, %v969
    %v976 = vmax.f32 %v960, %v972
    %v977 = vmax.f32 %v973, %v974
    %v978 = vmax.f32 %v975, %v976
    %v979 = vmax.f32 %v977, %v978
    %v980 = vsub.f32 %v951, %v979
    %v981 = vsub.f32 %v954, %v979
    %v982 = vsub.f32 %v957, %v979
    %v983 = vsub.f32 %v960, %v979
    %v984 = vsub.f32 %v963, %v979
    %v985 = vsub.f32 %v966, %v979
    %v986 = vsub.f32 %v969, %v979
    %v987 = vsub.f32 %v972, %v979
    %v988 = vmul.f32 %v980, 1.442695
    %v989 = vpow.pop %v988
    %v990 = vmul.f32 %v981, 1.442695
    %v991 = vpow.pop %v990
    %v992 = vmul.f32 %v982, 1.442695
    %v993 = vpow.pop %v992
    %v994 = vmul.f32 %v983, 1.442695
    %v995 = vpow.pop %v994
    %v996 = vmul.f32 %v984, 1.442695
    %v997 = vpow.pop %v996
    %v998 = vmul.f32 %v985, 1.442695
    %v999 = vpow.pop %v998
    %v1000 = vmul.f32 %v986, 1.442695
    %v1001 = vpow.pop %v1000
    %v1002 = vmul.f32 %v987, 1.442695
    %v1003 = vpow.pop %v1002
    %v1004 = vadd.f32 %v989, %v991
    %v1005 = vadd.f32 %v1004, %v993
    %v1006 = vadd.f32 %v1005, %v995
    %v1007 = vadd.f32 %v1006, %v997
    %v1008 = vadd.f32 %v1007, %v999
    %v1009 = vadd.f32 %v1008, %v1001
    %v1010 = vadd.f32 %v1009, %v1003
    %v1011 = vrcp.pop %v1010
    %v1012 = vmul.f32 %v989, %v1011
    %v1013 = vmul.f32 %v991, %v1011
    %v1014 = vmul.f32 %v993, %v1011
    %v1015 = vmul.f32 %v995, %v1011
    %v1016 = vmul.f32 %v997, %v1011
    %v1017 = vmul.f32 %v999, %v1011
    %v1018 = vmul.f32 %v1001, %v1011
    %v1019 = vmul.f32 %v1003, %v1011
    %v1020 = vmul.f32 %v1012, %v36
    %v1021 = vmul.f32 %v1013, %v37
    %v1022 = vmul.f32 %v1014, %v38
    %v1023 = vmul.f32 %v1015, %v39
    %v1024 = vmul.f32 %v1016, %v40
    %v1025 = vmul.f32 %v1017, %v41
    %v1026 = vmul.f32 %v1018, %v42
    %v1027 = vmul.f32 %v1019, %v43
    %v1028 = vsel %vm59, %v1020, 0.0
    %v1029 = vsel %vm59, %v1021, 0.0
    %v1030 = vadd.f32 %v1028, %v1029
    %v1031 = vsel %vm59, %v1022, 0.0
    %v1032 = vadd.f32 %v1030, %v1031
    %v1033 = vsel %vm59, %v1023, 0.0
    %v1034 = vadd.f32 %v1032, %v1033
    %v1035 = vsel %vm59, %v1024, 0.0
    %v1036 = vadd.f32 %v1034, %v1035
    %v1037 = vsel %vm59, %v1025, 0.0
    %v1038 = vadd.f32 %v1036, %v1037
    %v1039 = vsel %vm59, %v1026, 0.0
    %v1040 = vadd.f32 %v1038, %v1039
    %v1041 = vsel %vm59, %v1027, 0.0
    %v1042 = vadd.f32 %v1040, %v1041
    %s1043 = scalar_lea.vmem [#allocation2], 32
    %v1044 = vld [vmem:[%s1043] sm:$0xff]
    %v1045 = vld [vmem:[%s4] sm:$0xff]
    %v1046 = vld [vmem:[%s4 + $0x8] sm:$0xff]
    %v1047 = vld [vmem:[%s4 + $0x10] sm:$0xff]
    %v1048 = vld [vmem:[%s4 + $0x18] sm:$0xff]
    %v1050 = vsel %vm59, %v1042, 0
    %1052 = vmatpush.msra.mxu0 0.0
    %1053 = vmatpush.msra.mxu0 0.0
    %1054 = vmatpush.msra.mxu0 0.0
    %1055 = vmatpush.msra.mxu0 0.0
    %1056 = vmatpush.msra.mxu0 0.0
    %1057 = vmatpush.msra.mxu0 0.0
    %1058 = vmatpush.msra.mxu0 0.0
    %1059 = vmatpush.msra.mxu0 0.0
    %1060 = vmatpush.msra.mxu0 0.0
    %1061 = vmatpush.msra.mxu0 0.0
    %1062 = vmatpush.msra.mxu0 0.0
    %1063 = vmatpush.msra.mxu0 0.0
    %1064 = vmatpush.msra.mxu0 %v1048
    %1065 = vmatpush.msra.mxu0 %v1047
    %1066 = vmatpush.msra.mxu0 %v1046
    %1067 = vmatpush.msra.mxu0 %v1045
    %1068 = vmatmul.f32.gmra.mxu0 %v1050
    %v1069 = vpop.f32.mrf.mxu0
    %v1070 = vadd.f32 0.0, %v1069
    %1071 = vdwg.mxu0
    %v1072 = vadd.f32 %v1044, %v1070
    %v1073 = vld [vmem:[%s5] sm:$0xff]
    %v1074 = vld [vmem:[%s5 + $0x8] sm:$0xff]
    %v1075 = vld [vmem:[%s5 + $0x10] sm:$0xff]
    %v1076 = vld [vmem:[%s5 + $0x18] sm:$0xff]
    %v1077 = vsel %vm59, %v937, 0
    %1079 = vmatpush.msra.mxu0 0.0
    %1080 = vmatpush.msra.mxu0 0.0
    %1081 = vmatpush.msra.mxu0 0.0
    %1082 = vmatpush.msra.mxu0 0.0
    %1083 = vmatpush.msra.mxu0 0.0
    %1084 = vmatpush.msra.mxu0 0.0
    %1085 = vmatpush.msra.mxu0 0.0
    %1086 = vmatpush.msra.mxu0 0.0
    %1087 = vmatpush.msra.mxu0 0.0
    %1088 = vmatpush.msra.mxu0 0.0
    %1089 = vmatpush.msra.mxu0 0.0
    %1090 = vmatpush.msra.mxu0 0.0
    %1091 = vmatpush.msra.mxu0 %v1076
    %1092 = vmatpush.msra.mxu0 %v1075
    %1093 = vmatpush.msra.mxu0 %v1074
    %1094 = vmatpush.msra.mxu0 %v1073
    %1095 = vmatmul.f32.gmra.mxu0 %v1077
    %v1096 = vpop.f32.mrf.mxu0
    %v1097 = vadd.f32 0.0, %v1096
    %1098 = vdwg.mxu0
    %v1099 = vadd.f32 %v1072, %v1097
    %v1100 = vxor.u32 %v1099, 2147483648
    %v1101 = vmul.f32 %v1100, 1.442695
    %v1102 = vpow.pop %v1101
    %v1103 = vadd.f32 %v1102, 1.0
    %v1104 = vrcp.pop %v1103
    %v1105 = vmul.f32 %v1103, %v1104
    %v1106 = vsub.f32 1.0, %v1105
    %v1107 = vmul.f32 %v1104, %v1106
    %v1108 = vadd.f32 %v1104, %v1107
    %vm1109 = vweird.f32 %v1103
    %vm1110 = vweird.f32 %v1104
    %vm1111 = vmor %vm1109, %vm1110
    %v1112 = vsel %vm1111, %v1104, %v1108
    %v1113 = vand.u32 2147483647, %v1103
    %vm1114 = vcmp.eq.f32.partialorder %v1113, 8.507059e+37
    %v1115 = vand.u32 %v1103, 2147483648
    %v1116 = vor.u32 1.1754944e-38, %v1115
    %v1117 = vsel %vm1114, %v1116, %v1112
    %v1118 = vmul.f32 1.0, %v1117
    %1120 = vrot.lane.b32.xlu0 %v1099, 32
    %v1121 = vpop.permute.xlu0 %1120
    %v1123 = vmul.f32 %v1118, %v1121
    %1125 = vrot.lane.b32.xlu0 %v1123, 64
    %v1126 = vpop.permute.xlu0 %1125
    %v1128 = vadd.f32 %v1099, %v1126
    %v1129 = vtanh.pop %v1128
    %v1130 = vsub.f32 1.0, %v1118
    %1132 = vrot.lane.b32.xlu0 %v1129, 96
    %v1133 = vpop.permute.xlu0 %1132
    %v1135 = vmul.f32 %v1130, %v1133
    %v1136 = vmul.f32 %v1118, %v934
    %v1137 = vadd.f32 %v1135, %v1136
    %1139 = vrot.lane.b32.xlu0 %v1137, 96
    %v1140 = vpop.permute.xlu0 %1139
    %s1142 = scalar_lea.vmem [#allocation3], 32
    %1143 = vst.msk [vmem:[%s1142] sm:$0xff] %vm59, %v1140
    %v1144 = vmul.f32 %v36, %v1140
    %v1145 = vmul.f32 %v37, %v1140
    %v1146 = vmul.f32 %v38, %v1140
    %v1147 = vmul.f32 %v39, %v1140
    %v1148 = vmul.f32 %v40, %v1140
    %v1149 = vmul.f32 %v41, %v1140
    %v1150 = vmul.f32 %v42, %v1140
    %v1151 = vmul.f32 %v43, %v1140
    %v1152 = vsel %vm59, %v1144, 0.0
    %1153 = vadd.xlane.f32.xlu0 %v1152
    %v1154 = vpop.xlane.xlu0 %1153
    %v1155 = vsel %vm59, %v1145, 0.0
    %1156 = vadd.xlane.f32.xlu0 %v1155
    %v1157 = vpop.xlane.xlu0 %1156
    %v1158 = vsel %vm59, %v1146, 0.0
    %1159 = vadd.xlane.f32.xlu0 %v1158
    %v1160 = vpop.xlane.xlu0 %1159
    %v1161 = vsel %vm59, %v1147, 0.0
    %1162 = vadd.xlane.f32.xlu0 %v1161
    %v1163 = vpop.xlane.xlu0 %1162
    %v1164 = vsel %vm59, %v1148, 0.0
    %1165 = vadd.xlane.f32.xlu0 %v1164
    %v1166 = vpop.xlane.xlu0 %1165
    %v1167 = vsel %vm59, %v1149, 0.0
    %1168 = vadd.xlane.f32.xlu0 %v1167
    %v1169 = vpop.xlane.xlu0 %1168
    %v1170 = vsel %vm59, %v1150, 0.0
    %1171 = vadd.xlane.f32.xlu0 %v1170
    %v1172 = vpop.xlane.xlu0 %1171
    %v1173 = vsel %vm59, %v1151, 0.0
    %1174 = vadd.xlane.f32.xlu0 %v1173
    %v1175 = vpop.xlane.xlu0 %1174
    %v1176 = vmax.f32 %v1154, %v1166
    %v1177 = vmax.f32 %v1157, %v1169
    %v1178 = vmax.f32 %v1160, %v1172
    %v1179 = vmax.f32 %v1163, %v1175
    %v1180 = vmax.f32 %v1176, %v1177
    %v1181 = vmax.f32 %v1178, %v1179
    %v1182 = vmax.f32 %v1180, %v1181
    %v1183 = vsub.f32 %v1154, %v1182
    %v1184 = vsub.f32 %v1157, %v1182
    %v1185 = vsub.f32 %v1160, %v1182
    %v1186 = vsub.f32 %v1163, %v1182
    %v1187 = vsub.f32 %v1166, %v1182
    %v1188 = vsub.f32 %v1169, %v1182
    %v1189 = vsub.f32 %v1172, %v1182
    %v1190 = vsub.f32 %v1175, %v1182
    %v1191 = vmul.f32 %v1183, 1.442695
    %v1192 = vpow.pop %v1191
    %v1193 = vmul.f32 %v1184, 1.442695
    %v1194 = vpow.pop %v1193
    %v1195 = vmul.f32 %v1185, 1.442695
    %v1196 = vpow.pop %v1195
    %v1197 = vmul.f32 %v1186, 1.442695
    %v1198 = vpow.pop %v1197
    %v1199 = vmul.f32 %v1187, 1.442695
    %v1200 = vpow.pop %v1199
    %v1201 = vmul.f32 %v1188, 1.442695
    %v1202 = vpow.pop %v1201
    %v1203 = vmul.f32 %v1189, 1.442695
    %v1204 = vpow.pop %v1203
    %v1205 = vmul.f32 %v1190, 1.442695
    %v1206 = vpow.pop %v1205
    %v1207 = vadd.f32 %v1192, %v1194
    %v1208 = vadd.f32 %v1207, %v1196
    %v1209 = vadd.f32 %v1208, %v1198
    %v1210 = vadd.f32 %v1209, %v1200
    %v1211 = vadd.f32 %v1210, %v1202
    %v1212 = vadd.f32 %v1211, %v1204
    %v1213 = vadd.f32 %v1212, %v1206
    %v1214 = vrcp.pop %v1213
    %v1215 = vmul.f32 %v1192, %v1214
    %v1216 = vmul.f32 %v1194, %v1214
    %v1217 = vmul.f32 %v1196, %v1214
    %v1218 = vmul.f32 %v1198, %v1214
    %v1219 = vmul.f32 %v1200, %v1214
    %v1220 = vmul.f32 %v1202, %v1214
    %v1221 = vmul.f32 %v1204, %v1214
    %v1222 = vmul.f32 %v1206, %v1214
    %v1223 = vmul.f32 %v1215, %v36
    %v1224 = vmul.f32 %v1216, %v37
    %v1225 = vmul.f32 %v1217, %v38
    %v1226 = vmul.f32 %v1218, %v39
    %v1227 = vmul.f32 %v1219, %v40
    %v1228 = vmul.f32 %v1220, %v41
    %v1229 = vmul.f32 %v1221, %v42
    %v1230 = vmul.f32 %v1222, %v43
    %v1231 = vsel %vm59, %v1223, 0.0
    %v1232 = vsel %vm59, %v1224, 0.0
    %v1233 = vadd.f32 %v1231, %v1232
    %v1234 = vsel %vm59, %v1225, 0.0
    %v1235 = vadd.f32 %v1233, %v1234
    %v1236 = vsel %vm59, %v1226, 0.0
    %v1237 = vadd.f32 %v1235, %v1236
    %v1238 = vsel %vm59, %v1227, 0.0
    %v1239 = vadd.f32 %v1237, %v1238
    %v1240 = vsel %vm59, %v1228, 0.0
    %v1241 = vadd.f32 %v1239, %v1240
    %v1242 = vsel %vm59, %v1229, 0.0
    %v1243 = vadd.f32 %v1241, %v1242
    %v1244 = vsel %vm59, %v1230, 0.0
    %v1245 = vadd.f32 %v1243, %v1244
    %s1246 = scalar_lea.vmem [#allocation2], 40
    %v1247 = vld [vmem:[%s1246] sm:$0xff]
    %v1248 = vld [vmem:[%s4] sm:$0xff]
    %v1249 = vld [vmem:[%s4 + $0x8] sm:$0xff]
    %v1250 = vld [vmem:[%s4 + $0x10] sm:$0xff]
    %v1251 = vld [vmem:[%s4 + $0x18] sm:$0xff]
    %v1253 = vsel %vm59, %v1245, 0
    %1255 = vmatpush.msra.mxu0 0.0
    %1256 = vmatpush.msra.mxu0 0.0
    %1257 = vmatpush.msra.mxu0 0.0
    %1258 = vmatpush.msra.mxu0 0.0
    %1259 = vmatpush.msra.mxu0 0.0
    %1260 = vmatpush.msra.mxu0 0.0
    %1261 = vmatpush.msra.mxu0 0.0
    %1262 = vmatpush.msra.mxu0 0.0
    %1263 = vmatpush.msra.mxu0 0.0
    %1264 = vmatpush.msra.mxu0 0.0
    %1265 = vmatpush.msra.mxu0 0.0
    %1266 = vmatpush.msra.mxu0 0.0
    %1267 = vmatpush.msra.mxu0 %v1251
    %1268 = vmatpush.msra.mxu0 %v1250
    %1269 = vmatpush.msra.mxu0 %v1249
    %1270 = vmatpush.msra.mxu0 %v1248
    %1271 = vmatmul.f32.gmra.mxu0 %v1253
    %v1272 = vpop.f32.mrf.mxu0
    %v1273 = vadd.f32 0.0, %v1272
    %1274 = vdwg.mxu0
    %v1275 = vadd.f32 %v1247, %v1273
    %v1276 = vld [vmem:[%s5] sm:$0xff]
    %v1277 = vld [vmem:[%s5 + $0x8] sm:$0xff]
    %v1278 = vld [vmem:[%s5 + $0x10] sm:$0xff]
    %v1279 = vld [vmem:[%s5 + $0x18] sm:$0xff]
    %v1280 = vsel %vm59, %v1140, 0
    %1282 = vmatpush.msra.mxu0 0.0
    %1283 = vmatpush.msra.mxu0 0.0
    %1284 = vmatpush.msra.mxu0 0.0
    %1285 = vmatpush.msra.mxu0 0.0
    %1286 = vmatpush.msra.mxu0 0.0
    %1287 = vmatpush.msra.mxu0 0.0
    %1288 = vmatpush.msra.mxu0 0.0
    %1289 = vmatpush.msra.mxu0 0.0
    %1290 = vmatpush.msra.mxu0 0.0
    %1291 = vmatpush.msra.mxu0 0.0
    %1292 = vmatpush.msra.mxu0 0.0
    %1293 = vmatpush.msra.mxu0 0.0
    %1294 = vmatpush.msra.mxu0 %v1279
    %1295 = vmatpush.msra.mxu0 %v1278
    %1296 = vmatpush.msra.mxu0 %v1277
    %1297 = vmatpush.msra.mxu0 %v1276
    %1298 = vmatmul.f32.gmra.mxu0 %v1280
    %v1299 = vpop.f32.mrf.mxu0
    %v1300 = vadd.f32 0.0, %v1299
    %1301 = vdwg.mxu0
    %v1302 = vadd.f32 %v1275, %v1300
    %v1303 = vxor.u32 %v1302, 2147483648
    %v1304 = vmul.f32 %v1303, 1.442695
    %v1305 = vpow.pop %v1304
    %v1306 = vadd.f32 %v1305, 1.0
    %v1307 = vrcp.pop %v1306
    %v1308 = vmul.f32 %v1306, %v1307
    %v1309 = vsub.f32 1.0, %v1308
    %v1310 = vmul.f32 %v1307, %v1309
    %v1311 = vadd.f32 %v1307, %v1310
    %vm1312 = vweird.f32 %v1306
    %vm1313 = vweird.f32 %v1307
    %vm1314 = vmor %vm1312, %vm1313
    %v1315 = vsel %vm1314, %v1307, %v1311
    %v1316 = vand.u32 2147483647, %v1306
    %vm1317 = vcmp.eq.f32.partialorder %v1316, 8.507059e+37
    %v1318 = vand.u32 %v1306, 2147483648
    %v1319 = vor.u32 1.1754944e-38, %v1318
    %v1320 = vsel %vm1317, %v1319, %v1315
    %v1321 = vmul.f32 1.0, %v1320
    %1323 = vrot.lane.b32.xlu0 %v1302, 32
    %v1324 = vpop.permute.xlu0 %1323
    %v1326 = vmul.f32 %v1321, %v1324
    %1328 = vrot.lane.b32.xlu0 %v1326, 64
    %v1329 = vpop.permute.xlu0 %1328
    %v1331 = vadd.f32 %v1302, %v1329
    %v1332 = vtanh.pop %v1331
    %v1333 = vsub.f32 1.0, %v1321
    %1335 = vrot.lane.b32.xlu0 %v1332, 96
    %v1336 = vpop.permute.xlu0 %1335
    %v1338 = vmul.f32 %v1333, %v1336
    %v1339 = vmul.f32 %v1321, %v1137
    %v1340 = vadd.f32 %v1338, %v1339
    %1342 = vrot.lane.b32.xlu0 %v1340, 96
    %v1343 = vpop.permute.xlu0 %1342
    %s1345 = scalar_lea.vmem [#allocation3], 40
    %1346 = vst.msk [vmem:[%s1345] sm:$0xff] %vm59, %v1343
    %v1347 = vmul.f32 %v36, %v1343
    %v1348 = vmul.f32 %v37, %v1343
    %v1349 = vmul.f32 %v38, %v1343
    %v1350 = vmul.f32 %v39, %v1343
    %v1351 = vmul.f32 %v40, %v1343
    %v1352 = vmul.f32 %v41, %v1343
    %v1353 = vmul.f32 %v42, %v1343
    %v1354 = vmul.f32 %v43, %v1343
    %v1355 = vsel %vm59, %v1347, 0.0
    %1356 = vadd.xlane.f32.xlu0 %v1355
    %v1357 = vpop.xlane.xlu0 %1356
    %v1358 = vsel %vm59, %v1348, 0.0
    %1359 = vadd.xlane.f32.xlu0 %v1358
    %v1360 = vpop.xlane.xlu0 %1359
    %v1361 = vsel %vm59, %v1349, 0.0
    %1362 = vadd.xlane.f32.xlu0 %v1361
    %v1363 = vpop.xlane.xlu0 %1362
    %v1364 = vsel %vm59, %v1350, 0.0
    %1365 = vadd.xlane.f32.xlu0 %v1364
    %v1366 = vpop.xlane.xlu0 %1365
    %v1367 = vsel %vm59, %v1351, 0.0
    %1368 = vadd.xlane.f32.xlu0 %v1367
    %v1369 = vpop.xlane.xlu0 %1368
    %v1370 = vsel %vm59, %v1352, 0.0
    %1371 = vadd.xlane.f32.xlu0 %v1370
    %v1372 = vpop.xlane.xlu0 %1371
    %v1373 = vsel %vm59, %v1353, 0.0
    %1374 = vadd.xlane.f32.xlu0 %v1373
    %v1375 = vpop.xlane.xlu0 %1374
    %v1376 = vsel %vm59, %v1354, 0.0
    %1377 = vadd.xlane.f32.xlu0 %v1376
    %v1378 = vpop.xlane.xlu0 %1377
    %v1379 = vmax.f32 %v1357, %v1369
    %v1380 = vmax.f32 %v1360, %v1372
    %v1381 = vmax.f32 %v1363, %v1375
    %v1382 = vmax.f32 %v1366, %v1378
    %v1383 = vmax.f32 %v1379, %v1380
    %v1384 = vmax.f32 %v1381, %v1382
    %v1385 = vmax.f32 %v1383, %v1384
    %v1386 = vsub.f32 %v1357, %v1385
    %v1387 = vsub.f32 %v1360, %v1385
    %v1388 = vsub.f32 %v1363, %v1385
    %v1389 = vsub.f32 %v1366, %v1385
    %v1390 = vsub.f32 %v1369, %v1385
    %v1391 = vsub.f32 %v1372, %v1385
    %v1392 = vsub.f32 %v1375, %v1385
    %v1393 = vsub.f32 %v1378, %v1385
    %v1394 = vmul.f32 %v1386, 1.442695
    %v1395 = vpow.pop %v1394
    %v1396 = vmul.f32 %v1387, 1.442695
    %v1397 = vpow.pop %v1396
    %v1398 = vmul.f32 %v1388, 1.442695
    %v1399 = vpow.pop %v1398
    %v1400 = vmul.f32 %v1389, 1.442695
    %v1401 = vpow.pop %v1400
    %v1402 = vmul.f32 %v1390, 1.442695
    %v1403 = vpow.pop %v1402
    %v1404 = vmul.f32 %v1391, 1.442695
    %v1405 = vpow.pop %v1404
    %v1406 = vmul.f32 %v1392, 1.442695
    %v1407 = vpow.pop %v1406
    %v1408 = vmul.f32 %v1393, 1.442695
    %v1409 = vpow.pop %v1408
    %v1410 = vadd.f32 %v1395, %v1397
    %v1411 = vadd.f32 %v1410, %v1399
    %v1412 = vadd.f32 %v1411, %v1401
    %v1413 = vadd.f32 %v1412, %v1403
    %v1414 = vadd.f32 %v1413, %v1405
    %v1415 = vadd.f32 %v1414, %v1407
    %v1416 = vadd.f32 %v1415, %v1409
    %v1417 = vrcp.pop %v1416
    %v1418 = vmul.f32 %v1395, %v1417
    %v1419 = vmul.f32 %v1397, %v1417
    %v1420 = vmul.f32 %v1399, %v1417
    %v1421 = vmul.f32 %v1401, %v1417
    %v1422 = vmul.f32 %v1403, %v1417
    %v1423 = vmul.f32 %v1405, %v1417
    %v1424 = vmul.f32 %v1407, %v1417
    %v1425 = vmul.f32 %v1409, %v1417
    %v1426 = vmul.f32 %v1418, %v36
    %v1427 = vmul.f32 %v1419, %v37
    %v1428 = vmul.f32 %v1420, %v38
    %v1429 = vmul.f32 %v1421, %v39
    %v1430 = vmul.f32 %v1422, %v40
    %v1431 = vmul.f32 %v1423, %v41
    %v1432 = vmul.f32 %v1424, %v42
    %v1433 = vmul.f32 %v1425, %v43
    %v1434 = vsel %vm59, %v1426, 0.0
    %v1435 = vsel %vm59, %v1427, 0.0
    %v1436 = vadd.f32 %v1434, %v1435
    %v1437 = vsel %vm59, %v1428, 0.0
    %v1438 = vadd.f32 %v1436, %v1437
    %v1439 = vsel %vm59, %v1429, 0.0
    %v1440 = vadd.f32 %v1438, %v1439
    %v1441 = vsel %vm59, %v1430, 0.0
    %v1442 = vadd.f32 %v1440, %v1441
    %v1443 = vsel %vm59, %v1431, 0.0
    %v1444 = vadd.f32 %v1442, %v1443
    %v1445 = vsel %vm59, %v1432, 0.0
    %v1446 = vadd.f32 %v1444, %v1445
    %v1447 = vsel %vm59, %v1433, 0.0
    %v1448 = vadd.f32 %v1446, %v1447
    %s1449 = scalar_lea.vmem [#allocation2], 48
    %v1450 = vld [vmem:[%s1449] sm:$0xff]
    %v1451 = vld [vmem:[%s4] sm:$0xff]
    %v1452 = vld [vmem:[%s4 + $0x8] sm:$0xff]
    %v1453 = vld [vmem:[%s4 + $0x10] sm:$0xff]
    %v1454 = vld [vmem:[%s4 + $0x18] sm:$0xff]
    %v1456 = vsel %vm59, %v1448, 0
    %1458 = vmatpush.msra.mxu0 0.0
    %1459 = vmatpush.msra.mxu0 0.0
    %1460 = vmatpush.msra.mxu0 0.0
    %1461 = vmatpush.msra.mxu0 0.0
    %1462 = vmatpush.msra.mxu0 0.0
    %1463 = vmatpush.msra.mxu0 0.0
    %1464 = vmatpush.msra.mxu0 0.0
    %1465 = vmatpush.msra.mxu0 0.0
    %1466 = vmatpush.msra.mxu0 0.0
    %1467 = vmatpush.msra.mxu0 0.0
    %1468 = vmatpush.msra.mxu0 0.0
    %1469 = vmatpush.msra.mxu0 0.0
    %1470 = vmatpush.msra.mxu0 %v1454
    %1471 = vmatpush.msra.mxu0 %v1453
    %1472 = vmatpush.msra.mxu0 %v1452
    %1473 = vmatpush.msra.mxu0 %v1451
    %1474 = vmatmul.f32.gmra.mxu0 %v1456
    %v1475 = vpop.f32.mrf.mxu0
    %v1476 = vadd.f32 0.0, %v1475
    %1477 = vdwg.mxu0
    %v1478 = vadd.f32 %v1450, %v1476
    %v1479 = vld [vmem:[%s5] sm:$0xff]
    %v1480 = vld [vmem:[%s5 + $0x8] sm:$0xff]
    %v1481 = vld [vmem:[%s5 + $0x10] sm:$0xff]
    %v1482 = vld [vmem:[%s5 + $0x18] sm:$0xff]
    %v1483 = vsel %vm59, %v1343, 0
    %1485 = vmatpush.msra.mxu0 0.0
    %1486 = vmatpush.msra.mxu0 0.0
    %1487 = vmatpush.msra.mxu0 0.0
    %1488 = vmatpush.msra.mxu0 0.0
    %1489 = vmatpush.msra.mxu0 0.0
    %1490 = vmatpush.msra.mxu0 0.0
    %1491 = vmatpush.msra.mxu0 0.0
    %1492 = vmatpush.msra.mxu0 0.0
    %1493 = vmatpush.msra.mxu0 0.0
    %1494 = vmatpush.msra.mxu0 0.0
    %1495 = vmatpush.msra.mxu0 0.0
    %1496 = vmatpush.msra.mxu0 0.0
    %1497 = vmatpush.msra.mxu0 %v1482
    %1498 = vmatpush.msra.mxu0 %v1481
    %1499 = vmatpush.msra.mxu0 %v1480
    %1500 = vmatpush.msra.mxu0 %v1479
    %1501 = vmatmul.f32.gmra.mxu0 %v1483
    %v1502 = vpop.f32.mrf.mxu0
    %v1503 = vadd.f32 0.0, %v1502
    %1504 = vdwg.mxu0
    %v1505 = vadd.f32 %v1478, %v1503
    %v1506 = vxor.u32 %v1505, 2147483648
    %v1507 = vmul.f32 %v1506, 1.442695
    %v1508 = vpow.pop %v1507
    %v1509 = vadd.f32 %v1508, 1.0
    %v1510 = vrcp.pop %v1509
    %v1511 = vmul.f32 %v1509, %v1510
    %v1512 = vsub.f32 1.0, %v1511
    %v1513 = vmul.f32 %v1510, %v1512
    %v1514 = vadd.f32 %v1510, %v1513
    %vm1515 = vweird.f32 %v1509
    %vm1516 = vweird.f32 %v1510
    %vm1517 = vmor %vm1515, %vm1516
    %v1518 = vsel %vm1517, %v1510, %v1514
    %v1519 = vand.u32 2147483647, %v1509
    %vm1520 = vcmp.eq.f32.partialorder %v1519, 8.507059e+37
    %v1521 = vand.u32 %v1509, 2147483648
    %v1522 = vor.u32 1.1754944e-38, %v1521
    %v1523 = vsel %vm1520, %v1522, %v1518
    %v1524 = vmul.f32 1.0, %v1523
    %1526 = vrot.lane.b32.xlu0 %v1505, 32
    %v1527 = vpop.permute.xlu0 %1526
    %v1529 = vmul.f32 %v1524, %v1527
    %1531 = vrot.lane.b32.xlu0 %v1529, 64
    %v1532 = vpop.permute.xlu0 %1531
    %v1534 = vadd.f32 %v1505, %v1532
    %v1535 = vtanh.pop %v1534
    %v1536 = vsub.f32 1.0, %v1524
    %1538 = vrot.lane.b32.xlu0 %v1535, 96
    %v1539 = vpop.permute.xlu0 %1538
    %v1541 = vmul.f32 %v1536, %v1539
    %v1542 = vmul.f32 %v1524, %v1340
    %v1543 = vadd.f32 %v1541, %v1542
    %1545 = vrot.lane.b32.xlu0 %v1543, 96
    %v1546 = vpop.permute.xlu0 %1545
    %s1548 = scalar_lea.vmem [#allocation3], 48
    %1549 = vst.msk [vmem:[%s1548] sm:$0xff] %vm59, %v1546
    %1550 = vst.msk [vmem:[#allocation6] sm:$0xff] %vm59, %v1546
    %v1551 = vld [vmem:[#allocation3] sm:$0xff]
    %v1552 = vld [vmem:[#allocation3 + $0x8] sm:$0xff]
    %v1553 = vld [vmem:[#allocation3 + $0x10] sm:$0xff]
    %v1554 = vld [vmem:[#allocation3 + $0x18] sm:$0xff]
    %v1555 = vld [vmem:[#allocation3 + $0x20] sm:$0xff]
    %v1556 = vld [vmem:[#allocation3 + $0x28] sm:$0xff]
    %v1557 = vld [vmem:[#allocation3 + $0x30] sm:$0xff]
    %v1558 = vld [vmem:[%s7] sm:$0xff]
    %v1559 = vld [vmem:[%s7 + $0x8] sm:$0xff]
    %v1560 = vld [vmem:[%s7 + $0x10] sm:$0xff]
    %v1561 = vld [vmem:[%s7 + $0x18] sm:$0xff]
    %v1562 = vld [vmem:[%s8] sm:$0x1]
    %v1564 = vperm.slane %v1562, 0
    %v1567 = vsel %vm59, %v1551, 0
    %v1570 = vsel %vm59, %v1552, 0
    %v1573 = vsel %vm59, %v1553, 0
    %v1576 = vsel %vm59, %v1554, 0
    %v1579 = vsel %vm59, %v1555, 0
    %v1582 = vsel %vm59, %v1556, 0
    %v1585 = vsel %vm59, %v1557, 0
    %1587 = vmatpush.msra.mxu0 0.0
    %1588 = vmatpush.msra.mxu0 0.0
    %1589 = vmatpush.msra.mxu0 0.0
    %1590 = vmatpush.msra.mxu0 0.0
    %1591 = vmatpush.msra.mxu0 0.0
    %1592 = vmatpush.msra.mxu0 0.0
    %1593 = vmatpush.msra.mxu0 0.0
    %1594 = vmatpush.msra.mxu0 0.0
    %1595 = vmatpush.msra.mxu0 0.0
    %1596 = vmatpush.msra.mxu0 0.0
    %1597 = vmatpush.msra.mxu0 0.0
    %1598 = vmatpush.msra.mxu0 0.0
    %1599 = vmatpush.msra.mxu0 %v1561
    %1600 = vmatpush.msra.mxu0 %v1560
    %1601 = vmatpush.msra.mxu0 %v1559
    %1602 = vmatpush.msra.mxu0 %v1558
    %1603 = vmatmul.f32.gmra.mxu0 %v1567
    %v1604 = vpop.f32.mrf.mxu0
    %v1605 = vadd.f32 %v1564, %v1604
    %1606 = vmatmul.f32.gmra.mxu0 %v1570
    %v1607 = vpop.f32.mrf.mxu0
    %v1608 = vadd.f32 %v1564, %v1607
    %1609 = vmatmul.f32.gmra.mxu0 %v1573
    %v1610 = vpop.f32.mrf.mxu0
    %v1611 = vadd.f32 %v1564, %v1610
    %1612 = vmatmul.f32.gmra.mxu0 %v1576
    %v1613 = vpop.f32.mrf.mxu0
    %v1614 = vadd.f32 %v1564, %v1613
    %1615 = vmatmul.f32.gmra.mxu0 %v1579
    %v1616 = vpop.f32.mrf.mxu0
    %v1617 = vadd.f32 %v1564, %v1616
    %1618 = vmatmul.f32.gmra.mxu0 %v1582
    %v1619 = vpop.f32.mrf.mxu0
    %v1620 = vadd.f32 %v1564, %v1619
    %1621 = vmatmul.f32.gmra.mxu0 %v1585
    %v1622 = vpop.f32.mrf.mxu0
    %v1623 = vadd.f32 %v1564, %v1622
    %1624 = vdwg.mxu0
    %1625 = vst [vmem:[#allocation4] sm:$0xff] %v1605
    %1626 = vst [vmem:[#allocation4 + $0x8] sm:$0xff] %v1608
    %1627 = vst [vmem:[#allocation4 + $0x10] sm:$0xff] %v1611
    %1628 = vst [vmem:[#allocation4 + $0x18] sm:$0xff] %v1614
    %1629 = vst [vmem:[#allocation4 + $0x20] sm:$0xff] %v1617
    %1630 = vst [vmem:[#allocation4 + $0x28] sm:$0xff] %v1620
    %1631 = vst [vmem:[#allocation4 + $0x30] sm:$0xff] %v1623
    // Predicated region
    $region38: #{attention_decoder_forward.1} parent=1 // pred_check
      _
    $region39: #{attention_decoder_forward.1} parent=1 // pred_check_branch
      %1633 = sbr.rel (0) target = $region41
    $region40: #{attention_decoder_forward.1} parent=1 // pred_region
      %1635 = vsyncadd [#allocation5], 0
      %s1636 = sshll.u32 [#allocation4], 4
      %s1637 = int_to_ptr.vmem [resolvable:$true] %s1636
      %s1638 = sshll.u32 %s9, 4
      %s1639 = int_to_ptr.hbm [resolvable:$true] %s1638
      %1644 = dma.vmem_to_hbm [thread:$0]  %s1637, 896, %s1639, [#allocation5], 128, 128, 8
    $region41: #{attention_decoder_forward.1} parent=1 // pred_fallthru
      _
    // Predicated region
    $region42: #{attention_decoder_forward.1} parent=1 // pred_check
      _
    $region43: #{attention_decoder_forward.1} parent=1 // pred_check_branch
      %1646 = sbr.rel (0) target = $region45
    $region44: #{attention_decoder_forward.1} parent=1 // pred_region
      %1648 = vsyncadd [#allocation7], 0
      %s1650 = sshll.u32 [#allocation6], 4
      %s1651 = int_to_ptr.vmem [resolvable:$true] %s1650
      %s1652 = sshll.u32 %s10, 4
      %s1653 = int_to_ptr.hbm [resolvable:$true] %s1652
      %1655 = dma.vmem_to_hbm [thread:$0]  %s1651, 128, %s1653, [#allocation7]
    $region45: #{attention_decoder_forward.1} parent=1 // pred_fallthru
      _
    // Predicated region
    $region46: #{attention_decoder_forward.1} parent=1 // pred_check
      _
    $region47: #{attention_decoder_forward.1} parent=1 // pred_check_branch
      %1657 = sbr.rel (0) target = $region49
    $region48: #{attention_decoder_forward.1} parent=1 // pred_region
      %1659 = dma.done [#allocation5], 896
    $region49: #{attention_decoder_forward.1} parent=1 // pred_fallthru
      _
    // Predicated region
    $region50: #{attention_decoder_forward.1} parent=1 // pred_check
      _
    $region51: #{attention_decoder_forward.1} parent=1 // pred_check_branch
      %1661 = sbr.rel (0) target = $region53
    $region52: #{attention_decoder_forward.1} parent=1 // pred_region
      %1663 = dma.done [#allocation7], 128
    $region53: #{attention_decoder_forward.1} parent=1 // pred_fallthru
      _
    %1664 = vsyncpa [#allocation5], 1
    %1665 = vsyncpa [#allocation7], 1

</llo_original>
